<compile_context>
chip_gen: v7x
topology: tpu7x:2x2x1
jax: 0.10.0
libtpu: 0.0.40
codegen_flags: <defaults>
</compile_context>

<pallas_src>
import jax
import jax.numpy as jnp
from jax.experimental import pallas as pl
from jax.experimental.pallas import tpu as pltpu


# ---------------------------------------------------------------------------
# Geometry of the flattened padded-row-stride spatial layout.
# ---------------------------------------------------------------------------
def _round_up(x, m):
    return ((x + m - 1) // m) * m


def _geometry(H, W):
    """element (h, w) lives at lane  base + h*Wp + w  of a length-L buffer."""
    Wp = W + 2                              # >= W+2: two zero cols absorb +/-2 taps
    for cand in range(W + 2, W + 2 + 129):  # prefer H*Wp % 128 == 0 (lane-dense)
        if (H * cand) % 128 == 0:
            Wp = cand
            break
    N = H * Wp                              # flattened length of the valid rows
    base = _round_up(2 * Wp + 2, 128)       # every tap slice start stays >= 0
    L = _round_up(base + (H + 2) * Wp + 2, 128)
    return Wp, base, N, L


# ---------------------------------------------------------------------------
# Fused Pallas kernel: two conv_sknet blocks, one batch element per grid step.
# ---------------------------------------------------------------------------
def _make_up1_kernel(Wp, base, N, C1, inv_hw):

    def sknet_block(xflat, vm, w3_ref, w5_ref, sc3_ref, bi3_ref, sc5_ref,
                    bi5_ref, fcw_ref, fcb_ref, at_ref, bt_ref):
        """One conv_sknet block, channel-major (C, N) layout, all in VMEM."""

        def conv(w_ref, dil):
            # im2col: each 3x3 tap is a contiguous lane slice of the flat
            # buffer; stack the 9 slabs and do ONE MXU matmul (K = 9*Cin).
            parts = []
            for kh in range(3):
                for kw in range(3):
                    s = base + dil * (kh - 1) * Wp + dil * (kw - 1)
                    parts.append(xflat[:, s:s + N])
            col = jnp.concatenate(parts, axis=0).astype(jnp.bfloat16)
            return jnp.dot(w_ref[...], col,
                           preferred_element_type=jnp.float32)         # (Cout, N)

        # conv + folded BN + ReLU  (scale/bias are (Cout, 1) column vectors)
        x3 = jnp.maximum(conv(w3_ref, 1) * sc3_ref[...] + bi3_ref[...], 0.0)
        x5 = jnp.maximum(conv(w5_ref, 2) * sc5_ref[...] + bi5_ref[...], 0.0)

        # squeeze (masked global average pool) + excite + A/B gate
        pooled = jnp.sum((x3 + x5) * vm, axis=1, keepdims=True) * inv_hw   # (Cout,1)
        z = jnp.maximum(
            jnp.dot(fcw_ref[...], pooled, preferred_element_type=jnp.float32)
            + fcb_ref[...], 0.0)                                           # (hid, 1)
        zA = jnp.dot(at_ref[...], z, preferred_element_type=jnp.float32)   # (Cout,1)
        zB = jnp.dot(bt_ref[...], z, preferred_element_type=jnp.float32)
        # s1 = exp(zA)/(exp(zA)+exp(zB)) = sigmoid(zA - zB): overflow-safe,
        # one exp (EUP) + one approx reciprocal (EUP).
        s1 = pl.reciprocal(1.0 + jnp.exp(zB - zA), approx=True)
        return x3 * s1 + x5 * (1.0 - s1)                                   # (Cout, N)

    def kernel(x_ref, vmask_ref,
               w13_ref, w15_ref, s13_ref, b13_ref, s15_ref, b15_ref,
               f1w_ref, f1b_ref, a1_ref, g1_ref,
               w23_ref, w25_ref, s23_ref, b23_ref, s25_ref, b25_ref,
               f2w_ref, f2b_ref, a2_ref, g2_ref,
               out_ref, xs2_ref):
        vm = vmask_ref[...]                                  # (1, N): 1 where w < W

        # ---- block 1: conv_sknet(2*in_ch, in_ch) ------------------------------
        v1 = sknet_block(x_ref[...], vm, w13_ref, w15_ref, s13_ref, b13_ref,
                         s15_ref, b15_ref, f1w_ref, f1b_ref, a1_ref, g1_ref)

        # Re-pad the intermediate into the same flattened layout; it never
        # leaves VMEM between the two blocks.  (Masking the pad columns to 0
        # reproduces the zero 'same' padding of the second block.)
        xs2_ref[...] = jnp.zeros_like(xs2_ref)
        xs2_ref[:C1, base:base + N] = v1 * vm

        # ---- block 2: conv_sknet(in_ch, out_ch) -------------------------------
        out_ref[...] = sknet_block(xs2_ref[...], vm, w23_ref, w25_ref,
                                   s23_ref, b23_ref, s25_ref, b25_ref,
                                   f2w_ref, f2b_ref, a2_ref, g2_ref)

    return kernel


# ---------------------------------------------------------------------------
# Wrapper: layout packing + pallas_call.
# ---------------------------------------------------------------------------
def _pack_conv_w(w, cin_pad):
    """(Cout, Cin, 3, 3) torch-layout conv weight -> (Cout, 9*cin_pad) bf16,
    tap-major (kh, kw, cin) columns matching the in-kernel im2col order."""
    cout, cin = w.shape[0], w.shape[1]
    w = jnp.pad(w, ((0, 0), (0, cin_pad - cin), (0, 0), (0, 0)))
    return jnp.transpose(w, (0, 2, 3, 1)).reshape(cout, 9 * cin_pad).astype(jnp.bfloat16)


def up1_sknet_fused(x, p1, p2):
    """x: (B, C0, H, W) float32 NCHW.  Runs both conv_sknet blocks fused."""
    B, C0, H, W = x.shape
    C1 = p1["w3"].shape[0]                 # in_ch  (block-1 output channels)
    C2 = p2["w3"].shape[0]                 # out_ch
    Wp, base, N, L = _geometry(H, W)
    Cp0 = _round_up(C0, 8)                 # pad channels to sublane tiles so the
    Cp1 = _round_up(C1, 8)                 # in-kernel im2col concat is tile-aligned

    # Flattened, zero-padded, channel-major input buffer (built once in XLA).
    xc = jnp.pad(x, ((0, 0), (0, Cp0 - C0), (0, 0), (0, 0)))
    xw = jnp.pad(xc, ((0, 0), (0, 0), (0, 0), (0, Wp - W)))
    xf = jnp.pad(xw.reshape(B, Cp0, N), ((0, 0), (0, 0), (base, L - base - N)))

    # Column-validity mask over the flattened spatial axis (1 where w < W).
    vmask = (jnp.arange(N, dtype=jnp.int32) % Wp < W).astype(jnp.float32)
    vmask = vmask.reshape(1, N)

    params = (
        _pack_conv_w(p1["w3"], Cp0), _pack_conv_w(p1["w5"], Cp0),
        p1["sc3"], p1["bi3"], p1["sc5"], p1["bi5"],
        p1["fc_w"], p1["fc_b"], p1["At"], p1["Bt"],
        _pack_conv_w(p2["w3"], Cp1), _pack_conv_w(p2["w5"], Cp1),
        p2["sc3"], p2["bi3"], p2["sc5"], p2["bi5"],
        p2["fc_w"], p2["fc_b"], p2["At"], p2["Bt"],
    )

    def full_spec(a):
        return pl.BlockSpec(a.shape, lambda b, _n=a.ndim: (0,) * _n)

    kernel = _make_up1_kernel(Wp, base, N, C1, 1.0 / float(H * W))

    flops = 2 * B * N * 9 * (2 * Cp0 * C1 + 2 * Cp1 * C2)
    bytes_accessed = int(xf.size * xf.dtype.itemsize + B * C2 * N * 4
                         + sum(int(a.size) * a.dtype.itemsize for a in params))

    out_flat = pl.pallas_call(
        kernel,
        out_shape=jax.ShapeDtypeStruct((B, C2, N), jnp.float32),
        grid_spec=pltpu.PrefetchScalarGridSpec(
            num_scalar_prefetch=0,
            grid=(B,),
            in_specs=[pl.BlockSpec((None, Cp0, L), lambda b: (b, 0, 0)),
                      full_spec(vmask)] + [full_spec(a) for a in params],
            out_specs=pl.BlockSpec((None, C2, N), lambda b: (b, 0, 0)),
            scratch_shapes=[pltpu.VMEM((Cp1, L), jnp.float32)],
        ),
        compiler_params=pltpu.CompilerParams(
            dimension_semantics=("parallel",)),   # batch is embarrassingly parallel
        cost_estimate=pl.CostEstimate(
            flops=flops,
            transcendentals=2 * B * (C1 + C2),
            bytes_accessed=bytes_accessed),
    )(xf, vmask, *params)

    # Drop the pad columns: (B, C2, H*Wp) -> (B, C2, H, W).  Free-ish in XLA.
    return out_flat.reshape(B, C2, H, Wp)[:, :, :, :W]


# ---------------------------------------------------------------------------
# Plain-JAX glue: bilinear x2 upsample (align_corners=True), NCHW.
# ---------------------------------------------------------------------------
def upsample_bilinear_x2_align_corners(x):
    B, C, H, W = x.shape
    Ho, Wo = 2 * H, 2 * W

    def coords(n_in, n_out):
        if n_in == 1:
            z = jnp.zeros((n_out,), jnp.int32)
            return jnp.zeros((n_out,), jnp.float32), z, z
        pos = jnp.arange(n_out, dtype=jnp.float32) * (n_in - 1) / (n_out - 1)
        lo = jnp.floor(pos).astype(jnp.int32)
        hi = jnp.minimum(lo + 1, n_in - 1)
        return pos - lo.astype(jnp.float32), lo, hi

    fh, h0, h1 = coords(H, Ho)
    fw, w0, w1 = coords(W, Wo)
    fh_ = fh[None, None, :, None]
    fw_ = fw[None, None, None, :]
    r0 = x[:, :, h0, :]
    r1 = x[:, :, h1, :]
    top = r0[:, :, :, w0] * (1.0 - fw_) + r0[:, :, :, w1] * fw_
    bot = r1[:, :, :, w0] * (1.0 - fw_) + r1[:, :, :, w1] * fw_
    return top * (1.0 - fh_) + bot * fh_


# ---------------------------------------------------------------------------
# Deterministic synthetic parameters (BN folded with inference stats).
# ---------------------------------------------------------------------------
def init_conv_sknet(key, in_ch, out_ch, reduction=16):
    hidden = max(out_ch // reduction, 32)
    ks = jax.random.split(key, 12)
    u = lambda k, s, lo, hi: jax.random.uniform(k, s, jnp.float32, lo, hi)

    w3 = u(ks[0], (out_ch, in_ch, 3, 3), -0.2, 0.2)     # torch Conv2d layout
    b3 = u(ks[1], (out_ch,), -0.1, 0.1)
    w5 = u(ks[2], (out_ch, in_ch, 3, 3), -0.2, 0.2)
    b5 = u(ks[3], (out_ch,), -0.1, 0.1)
    g3 = u(ks[4], (out_ch,), 0.8, 1.2)
    be3 = u(ks[5], (out_ch,), -0.1, 0.1)
    g5 = u(ks[6], (out_ch,), 0.8, 1.2)
    be5 = u(ks[7], (out_ch,), -0.1, 0.1)

    eps = 1e-5
    sc3 = g3 / jnp.sqrt(1.0 + eps)          # fold BN (mean=0, var=1) + conv bias
    bi3 = be3 + b3 * sc3
    sc5 = g5 / jnp.sqrt(1.0 + eps)
    bi5 = be5 + b5 * sc5

    fc_w = u(ks[8], (hidden, out_ch), -0.3, 0.3)        # torch Linear layout
    fc_b = u(ks[9], (hidden,), -0.1, 0.1)
    A = jax.random.uniform(ks[10], (hidden, out_ch), jnp.float32)
    B = jax.random.uniform(ks[11], (hidden, out_ch), jnp.float32)

    return {
        "w3": w3, "w5": w5,
        "sc3": sc3.reshape(out_ch, 1), "bi3": bi3.reshape(out_ch, 1),
        "sc5": sc5.reshape(out_ch, 1), "bi5": bi5.reshape(out_ch, 1),
        "fc_w": fc_w, "fc_b": fc_b.reshape(hidden, 1),
        "At": A.T, "Bt": B.T,
    }


# ---------------------------------------------------------------------------
# Up1 forward (NCHW in / NCHW out, like the PyTorch module).
# ---------------------------------------------------------------------------
@jax.jit
def up1_forward(x1, x2, params1, params2):
    x1_up = upsample_bilinear_x2_align_corners(x1)
    x = jnp.concatenate([x2, x1_up], axis=1)     # torch.cat([x2, x1], dim=1)
    return up1_sknet_fused(x, params1, params2)


if __name__ == "__main__":
    in_ch, out_ch = 4, 4
    B, H, W = 2, 8, 8                            # x1 spatial; x2 is 2H x 2W

    key = jax.random.PRNGKey(0)
    k1, k2, kp1, kp2 = jax.random.split(key, 4)

    x1 = jax.random.normal(k1, (B, in_ch, H, W), jnp.float32)
    x2 = jax.random.normal(k2, (B, in_ch, 2 * H, 2 * W), jnp.float32)

    params1 = init_conv_sknet(kp1, 2 * in_ch, in_ch)    # conv_sknet(2*in_ch, in_ch)
    params2 = init_conv_sknet(kp2, in_ch, out_ch)       # conv_sknet(in_ch, out_ch)

    out = jax.block_until_ready(up1_forward(x1, x2, params1, params2))

    assert out.shape == (B, out_ch, 2 * H, 2 * W), out.shape
    assert bool(jnp.all(jnp.isfinite(out)))
    print("KERNEL_OK")
</pallas_src>

<mosaic_0001>
module attributes {stable_mosaic.version = 11 : i64} {
  func.func @kernel(%arg0: i32, %arg1: memref<1x8x640xf32, #tpu.memory_space<vmem>>, %arg2: memref<1x384xf32, #tpu.memory_space<vmem>>, %arg3: memref<4x72xbf16, #tpu.memory_space<vmem>>, %arg4: memref<4x72xbf16, #tpu.memory_space<vmem>>, %arg5: memref<4x1xf32, #tpu.memory_space<vmem>>, %arg6: memref<4x1xf32, #tpu.memory_space<vmem>>, %arg7: memref<4x1xf32, #tpu.memory_space<vmem>>, %arg8: memref<4x1xf32, #tpu.memory_space<vmem>>, %arg9: memref<32x4xf32, #tpu.memory_space<vmem>>, %arg10: memref<32x1xf32, #tpu.memory_space<vmem>>, %arg11: memref<4x32xf32, #tpu.memory_space<vmem>>, %arg12: memref<4x32xf32, #tpu.memory_space<vmem>>, %arg13: memref<4x72xbf16, #tpu.memory_space<vmem>>, %arg14: memref<4x72xbf16, #tpu.memory_space<vmem>>, %arg15: memref<4x1xf32, #tpu.memory_space<vmem>>, %arg16: memref<4x1xf32, #tpu.memory_space<vmem>>, %arg17: memref<4x1xf32, #tpu.memory_space<vmem>>, %arg18: memref<4x1xf32, #tpu.memory_space<vmem>>, %arg19: memref<32x4xf32, #tpu.memory_space<vmem>>, %arg20: memref<32x1xf32, #tpu.memory_space<vmem>>, %arg21: memref<4x32xf32, #tpu.memory_space<vmem>>, %arg22: memref<4x32xf32, #tpu.memory_space<vmem>>, %arg23: memref<1x4x384xf32, #tpu.memory_space<vmem>>, %arg24: memref<8x640xf32, #tpu.memory_space<vmem>>) attributes {dimension_semantics = [#tpu.dimension_semantics<parallel>], iteration_bounds = array<i64: 2>, scalar_prefetch = 0 : i64, scratch_operands = 1 : i64, tpu.core_type = #tpu.core_type<tc>, window_params = [{transform_indices = @transform_0, window_bounds = array<i64: 1, 8, 640>}, {pipeline_mode = #tpu.pipeline_mode<synchronous>, transform_indices = @transform_1, window_bounds = array<i64: 1, 384>}, {pipeline_mode = #tpu.pipeline_mode<synchronous>, transform_indices = @transform_2, window_bounds = array<i64: 4, 72>}, {pipeline_mode = #tpu.pipeline_mode<synchronous>, transform_indices = @transform_3, window_bounds = array<i64: 4, 72>}, {pipeline_mode = #tpu.pipeline_mode<synchronous>, transform_indices = @transform_4, window_bounds = array<i64: 4, 1>}, {pipeline_mode = #tpu.pipeline_mode<synchronous>, transform_indices = @transform_5, window_bounds = array<i64: 4, 1>}, {pipeline_mode = #tpu.pipeline_mode<synchronous>, transform_indices = @transform_6, window_bounds = array<i64: 4, 1>}, {pipeline_mode = #tpu.pipeline_mode<synchronous>, transform_indices = @transform_7, window_bounds = array<i64: 4, 1>}, {pipeline_mode = #tpu.pipeline_mode<synchronous>, transform_indices = @transform_8, window_bounds = array<i64: 32, 4>}, {pipeline_mode = #tpu.pipeline_mode<synchronous>, transform_indices = @transform_9, window_bounds = array<i64: 32, 1>}, {pipeline_mode = #tpu.pipeline_mode<synchronous>, transform_indices = @transform_10, window_bounds = array<i64: 4, 32>}, {pipeline_mode = #tpu.pipeline_mode<synchronous>, transform_indices = @transform_11, window_bounds = array<i64: 4, 32>}, {pipeline_mode = #tpu.pipeline_mode<synchronous>, transform_indices = @transform_12, window_bounds = array<i64: 4, 72>}, {pipeline_mode = #tpu.pipeline_mode<synchronous>, transform_indices = @transform_13, window_bounds = array<i64: 4, 72>}, {pipeline_mode = #tpu.pipeline_mode<synchronous>, transform_indices = @transform_14, window_bounds = array<i64: 4, 1>}, {pipeline_mode = #tpu.pipeline_mode<synchronous>, transform_indices = @transform_15, window_bounds = array<i64: 4, 1>}, {pipeline_mode = #tpu.pipeline_mode<synchronous>, transform_indices = @transform_16, window_bounds = array<i64: 4, 1>}, {pipeline_mode = #tpu.pipeline_mode<synchronous>, transform_indices = @transform_17, window_bounds = array<i64: 4, 1>}, {pipeline_mode = #tpu.pipeline_mode<synchronous>, transform_indices = @transform_18, window_bounds = array<i64: 32, 4>}, {pipeline_mode = #tpu.pipeline_mode<synchronous>, transform_indices = @transform_19, window_bounds = array<i64: 32, 1>}, {pipeline_mode = #tpu.pipeline_mode<synchronous>, transform_indices = @transform_20, window_bounds = array<i64: 4, 32>}, {pipeline_mode = #tpu.pipeline_mode<synchronous>, transform_indices = @transform_21, window_bounds = array<i64: 4, 32>}, {transform_indices = @transform_22, window_bounds = array<i64: 1, 4, 384>}]} {
    %c0 = arith.constant 0 : index
    %c0_0 = arith.constant 0 : index
    %0 = vector.load %arg2[%c0, %c0_0] : memref<1x384xf32, #tpu.memory_space<vmem>>, vector<1x384xf32>
    %c0_1 = arith.constant 0 : index
    %c0_2 = arith.constant 0 : index
    %c0_3 = arith.constant 0 : index
    %1 = vector.load %arg1[%c0_1, %c0_2, %c0_3] : memref<1x8x640xf32, #tpu.memory_space<vmem>>, vector<1x8x640xf32>
    %2 = vector.shape_cast %1 : vector<1x8x640xf32> to vector<8x640xf32>
    %3 = vector.extract_strided_slice %2 {offsets = [0, 103], sizes = [8, 384], strides = [1, 1]} : vector<8x640xf32> to vector<8x384xf32>
    %4 = vector.extract_strided_slice %2 {offsets = [0, 104], sizes = [8, 384], strides = [1, 1]} : vector<8x640xf32> to vector<8x384xf32>
    %5 = vector.extract_strided_slice %2 {offsets = [0, 105], sizes = [8, 384], strides = [1, 1]} : vector<8x640xf32> to vector<8x384xf32>
    %6 = vector.extract_strided_slice %2 {offsets = [0, 127], sizes = [8, 384], strides = [1, 1]} : vector<8x640xf32> to vector<8x384xf32>
    %7 = vector.extract_strided_slice %2 {offsets = [0, 128], sizes = [8, 384], strides = [1, 1]} : vector<8x640xf32> to vector<8x384xf32>
    %8 = vector.extract_strided_slice %2 {offsets = [0, 129], sizes = [8, 384], strides = [1, 1]} : vector<8x640xf32> to vector<8x384xf32>
    %9 = vector.extract_strided_slice %2 {offsets = [0, 151], sizes = [8, 384], strides = [1, 1]} : vector<8x640xf32> to vector<8x384xf32>
    %10 = vector.extract_strided_slice %2 {offsets = [0, 152], sizes = [8, 384], strides = [1, 1]} : vector<8x640xf32> to vector<8x384xf32>
    %11 = vector.extract_strided_slice %2 {offsets = [0, 153], sizes = [8, 384], strides = [1, 1]} : vector<8x640xf32> to vector<8x384xf32>
    %12 = tpu.concatenate %3, %4, %5, %6, %7, %8, %9, %10, %11 in 0 : vector<8x384xf32>, vector<8x384xf32>, vector<8x384xf32>, vector<8x384xf32>, vector<8x384xf32>, vector<8x384xf32>, vector<8x384xf32>, vector<8x384xf32>, vector<8x384xf32> -> vector<72x384xf32>
    %13 = arith.truncf %12 : vector<72x384xf32> to vector<72x384xbf16>
    %c0_4 = arith.constant 0 : index
    %c0_5 = arith.constant 0 : index
    %14 = vector.load %arg3[%c0_4, %c0_5] : memref<4x72xbf16, #tpu.memory_space<vmem>>, vector<4x72xbf16>
    %cst = arith.constant dense<0.000000e+00> : vector<4x384xf32>
    %15 = tpu.matmul %14, %13, %cst {dimension_numbers = #tpu.dot_dimension_numbers<[1], [0], [0], [1], [0, 0, 1, 1], [], []>} : vector<4x72xbf16>, vector<72x384xbf16>, vector<4x384xf32> -> vector<4x384xf32>
    %c0_6 = arith.constant 0 : index
    %c0_7 = arith.constant 0 : index
    %16 = vector.load %arg5[%c0_6, %c0_7] : memref<4x1xf32, #tpu.memory_space<vmem>>, vector<4x1xf32>
    %17 = vector.broadcast %16 : vector<4x1xf32> to vector<4x384xf32>
    %18 = arith.mulf %15, %17 : vector<4x384xf32>
    %c0_8 = arith.constant 0 : index
    %c0_9 = arith.constant 0 : index
    %19 = vector.load %arg6[%c0_8, %c0_9] : memref<4x1xf32, #tpu.memory_space<vmem>>, vector<4x1xf32>
    %20 = vector.broadcast %19 : vector<4x1xf32> to vector<4x384xf32>
    %21 = arith.addf %18, %20 : vector<4x384xf32>
    %cst_10 = arith.constant 0.000000e+00 : f32
    %22 = vector.broadcast %cst_10 : f32 to vector<4x384xf32>
    %23 = arith.maximumf %21, %22 : vector<4x384xf32>
    %24 = vector.extract_strided_slice %2 {offsets = [0, 78], sizes = [8, 384], strides = [1, 1]} : vector<8x640xf32> to vector<8x384xf32>
    %25 = vector.extract_strided_slice %2 {offsets = [0, 80], sizes = [8, 384], strides = [1, 1]} : vector<8x640xf32> to vector<8x384xf32>
    %26 = vector.extract_strided_slice %2 {offsets = [0, 82], sizes = [8, 384], strides = [1, 1]} : vector<8x640xf32> to vector<8x384xf32>
    %27 = vector.extract_strided_slice %2 {offsets = [0, 126], sizes = [8, 384], strides = [1, 1]} : vector<8x640xf32> to vector<8x384xf32>
    %28 = vector.extract_strided_slice %2 {offsets = [0, 128], sizes = [8, 384], strides = [1, 1]} : vector<8x640xf32> to vector<8x384xf32>
    %29 = vector.extract_strided_slice %2 {offsets = [0, 130], sizes = [8, 384], strides = [1, 1]} : vector<8x640xf32> to vector<8x384xf32>
    %30 = vector.extract_strided_slice %2 {offsets = [0, 174], sizes = [8, 384], strides = [1, 1]} : vector<8x640xf32> to vector<8x384xf32>
    %31 = vector.extract_strided_slice %2 {offsets = [0, 176], sizes = [8, 384], strides = [1, 1]} : vector<8x640xf32> to vector<8x384xf32>
    %32 = vector.extract_strided_slice %2 {offsets = [0, 178], sizes = [8, 384], strides = [1, 1]} : vector<8x640xf32> to vector<8x384xf32>
    %33 = tpu.concatenate %24, %25, %26, %27, %28, %29, %30, %31, %32 in 0 : vector<8x384xf32>, vector<8x384xf32>, vector<8x384xf32>, vector<8x384xf32>, vector<8x384xf32>, vector<8x384xf32>, vector<8x384xf32>, vector<8x384xf32>, vector<8x384xf32> -> vector<72x384xf32>
    %34 = arith.truncf %33 : vector<72x384xf32> to vector<72x384xbf16>
    %c0_11 = arith.constant 0 : index
    %c0_12 = arith.constant 0 : index
    %35 = vector.load %arg4[%c0_11, %c0_12] : memref<4x72xbf16, #tpu.memory_space<vmem>>, vector<4x72xbf16>
    %cst_13 = arith.constant dense<0.000000e+00> : vector<4x384xf32>
    %36 = tpu.matmul %35, %34, %cst_13 {dimension_numbers = #tpu.dot_dimension_numbers<[1], [0], [0], [1], [0, 0, 1, 1], [], []>} : vector<4x72xbf16>, vector<72x384xbf16>, vector<4x384xf32> -> vector<4x384xf32>
    %c0_14 = arith.constant 0 : index
    %c0_15 = arith.constant 0 : index
    %37 = vector.load %arg7[%c0_14, %c0_15] : memref<4x1xf32, #tpu.memory_space<vmem>>, vector<4x1xf32>
    %38 = vector.broadcast %37 : vector<4x1xf32> to vector<4x384xf32>
    %39 = arith.mulf %36, %38 : vector<4x384xf32>
    %c0_16 = arith.constant 0 : index
    %c0_17 = arith.constant 0 : index
    %40 = vector.load %arg8[%c0_16, %c0_17] : memref<4x1xf32, #tpu.memory_space<vmem>>, vector<4x1xf32>
    %41 = vector.broadcast %40 : vector<4x1xf32> to vector<4x384xf32>
    %42 = arith.addf %39, %41 : vector<4x384xf32>
    %cst_18 = arith.constant 0.000000e+00 : f32
    %43 = vector.broadcast %cst_18 : f32 to vector<4x384xf32>
    %44 = arith.maximumf %42, %43 : vector<4x384xf32>
    %45 = arith.addf %23, %44 : vector<4x384xf32>
    %46 = vector.broadcast %0 : vector<1x384xf32> to vector<4x384xf32>
    %47 = arith.mulf %45, %46 : vector<4x384xf32>
    %cst_19 = arith.constant dense<0.000000e+00> : vector<4xf32>
    %48 = vector.multi_reduction <add>, %47, %cst_19 [1] : vector<4x384xf32> to vector<4xf32>
    %49 = vector.shape_cast %48 : vector<4xf32> to vector<4x1xf32>
    %cst_20 = arith.constant 3.906250e-03 : f32
    %50 = vector.broadcast %cst_20 : f32 to vector<4x1xf32>
    %51 = arith.mulf %49, %50 : vector<4x1xf32>
    %c0_21 = arith.constant 0 : index
    %c0_22 = arith.constant 0 : index
    %52 = vector.load %arg9[%c0_21, %c0_22] : memref<32x4xf32, #tpu.memory_space<vmem>>, vector<32x4xf32>
    %cst_23 = arith.constant dense<0.000000e+00> : vector<32x1xf32>
    %53 = tpu.matmul %52, %51, %cst_23 {dimension_numbers = #tpu.dot_dimension_numbers<[1], [0], [0], [1], [0, 0, 1, 1], [], []>} : vector<32x4xf32>, vector<4x1xf32>, vector<32x1xf32> -> vector<32x1xf32>
    %c0_24 = arith.constant 0 : index
    %c0_25 = arith.constant 0 : index
    %54 = vector.load %arg10[%c0_24, %c0_25] : memref<32x1xf32, #tpu.memory_space<vmem>>, vector<32x1xf32>
    %55 = arith.addf %53, %54 : vector<32x1xf32>
    %cst_26 = arith.constant 0.000000e+00 : f32
    %56 = vector.broadcast %cst_26 : f32 to vector<32x1xf32>
    %57 = arith.maximumf %55, %56 : vector<32x1xf32>
    %c0_27 = arith.constant 0 : index
    %c0_28 = arith.constant 0 : index
    %58 = vector.load %arg11[%c0_27, %c0_28] : memref<4x32xf32, #tpu.memory_space<vmem>>, vector<4x32xf32>
    %cst_29 = arith.constant dense<0.000000e+00> : vector<4x1xf32>
    %59 = tpu.matmul %58, %57, %cst_29 {dimension_numbers = #tpu.dot_dimension_numbers<[1], [0], [0], [1], [0, 0, 1, 1], [], []>} : vector<4x32xf32>, vector<32x1xf32>, vector<4x1xf32> -> vector<4x1xf32>
    %c0_30 = arith.constant 0 : index
    %c0_31 = arith.constant 0 : index
    %60 = vector.load %arg12[%c0_30, %c0_31] : memref<4x32xf32, #tpu.memory_space<vmem>>, vector<4x32xf32>
    %cst_32 = arith.constant dense<0.000000e+00> : vector<4x1xf32>
    %61 = tpu.matmul %60, %57, %cst_32 {dimension_numbers = #tpu.dot_dimension_numbers<[1], [0], [0], [1], [0, 0, 1, 1], [], []>} : vector<4x32xf32>, vector<32x1xf32>, vector<4x1xf32> -> vector<4x1xf32>
    %62 = arith.subf %61, %59 : vector<4x1xf32>
    %63 = math.exp %62 : vector<4x1xf32>
    %cst_33 = arith.constant 1.000000e+00 : f32
    %64 = vector.broadcast %cst_33 : f32 to vector<4x1xf32>
    %65 = arith.addf %64, %63 : vector<4x1xf32>
    %66 = tpu.reciprocal %65 {approx = true} : vector<4x1xf32> -> vector<4x1xf32>
    %67 = vector.broadcast %66 : vector<4x1xf32> to vector<4x384xf32>
    %68 = arith.mulf %23, %67 : vector<4x384xf32>
    %cst_34 = arith.constant 1.000000e+00 : f32
    %69 = vector.broadcast %cst_34 : f32 to vector<4x1xf32>
    %70 = arith.subf %69, %66 : vector<4x1xf32>
    %71 = vector.broadcast %70 : vector<4x1xf32> to vector<4x384xf32>
    %72 = arith.mulf %44, %71 : vector<4x384xf32>
    %73 = arith.addf %68, %72 : vector<4x384xf32>
    %cst_35 = arith.constant 0.000000e+00 : f32
    %74 = vector.broadcast %cst_35 : f32 to vector<8x640xf32>
    %c0_36 = arith.constant 0 : index
    %c0_37 = arith.constant 0 : index
    %75 = vector.load %arg24[%c0_36, %c0_37] : memref<8x640xf32, #tpu.memory_space<vmem>>, vector<8x640xf32>
    tpu.vector_store %arg24[%c0_36, %c0_37], %74 {strides = array<i32>} : memref<8x640xf32, #tpu.memory_space<vmem>>, vector<8x640xf32>,
    %76 = vector.broadcast %0 : vector<1x384xf32> to vector<4x384xf32>
    %77 = arith.mulf %73, %76 : vector<4x384xf32>
    %c0_38 = arith.constant 0 : index
    %c128 = arith.constant 128 : index
    %78 = vector.load %arg24[%c0_38, %c128] : memref<8x640xf32, #tpu.memory_space<vmem>>, vector<4x384xf32>
    tpu.vector_store %arg24[%c0_38, %c128], %77 {strides = array<i32>} : memref<8x640xf32, #tpu.memory_space<vmem>>, vector<4x384xf32>,
    %c0_39 = arith.constant 0 : index
    %c0_40 = arith.constant 0 : index
    %79 = vector.load %arg24[%c0_39, %c0_40] : memref<8x640xf32, #tpu.memory_space<vmem>>, vector<8x640xf32>
    %80 = vector.extract_strided_slice %79 {offsets = [0, 103], sizes = [8, 384], strides = [1, 1]} : vector<8x640xf32> to vector<8x384xf32>
    %81 = vector.extract_strided_slice %79 {offsets = [0, 104], sizes = [8, 384], strides = [1, 1]} : vector<8x640xf32> to vector<8x384xf32>
    %82 = vector.extract_strided_slice %79 {offsets = [0, 105], sizes = [8, 384], strides = [1, 1]} : vector<8x640xf32> to vector<8x384xf32>
    %83 = vector.extract_strided_slice %79 {offsets = [0, 127], sizes = [8, 384], strides = [1, 1]} : vector<8x640xf32> to vector<8x384xf32>
    %84 = vector.extract_strided_slice %79 {offsets = [0, 128], sizes = [8, 384], strides = [1, 1]} : vector<8x640xf32> to vector<8x384xf32>
    %85 = vector.extract_strided_slice %79 {offsets = [0, 129], sizes = [8, 384], strides = [1, 1]} : vector<8x640xf32> to vector<8x384xf32>
    %86 = vector.extract_strided_slice %79 {offsets = [0, 151], sizes = [8, 384], strides = [1, 1]} : vector<8x640xf32> to vector<8x384xf32>
    %87 = vector.extract_strided_slice %79 {offsets = [0, 152], sizes = [8, 384], strides = [1, 1]} : vector<8x640xf32> to vector<8x384xf32>
    %88 = vector.extract_strided_slice %79 {offsets = [0, 153], sizes = [8, 384], strides = [1, 1]} : vector<8x640xf32> to vector<8x384xf32>
    %89 = tpu.concatenate %80, %81, %82, %83, %84, %85, %86, %87, %88 in 0 : vector<8x384xf32>, vector<8x384xf32>, vector<8x384xf32>, vector<8x384xf32>, vector<8x384xf32>, vector<8x384xf32>, vector<8x384xf32>, vector<8x384xf32>, vector<8x384xf32> -> vector<72x384xf32>
    %90 = arith.truncf %89 : vector<72x384xf32> to vector<72x384xbf16>
    %c0_41 = arith.constant 0 : index
    %c0_42 = arith.constant 0 : index
    %91 = vector.load %arg13[%c0_41, %c0_42] : memref<4x72xbf16, #tpu.memory_space<vmem>>, vector<4x72xbf16>
    %cst_43 = arith.constant dense<0.000000e+00> : vector<4x384xf32>
    %92 = tpu.matmul %91, %90, %cst_43 {dimension_numbers = #tpu.dot_dimension_numbers<[1], [0], [0], [1], [0, 0, 1, 1], [], []>} : vector<4x72xbf16>, vector<72x384xbf16>, vector<4x384xf32> -> vector<4x384xf32>
    %c0_44 = arith.constant 0 : index
    %c0_45 = arith.constant 0 : index
    %93 = vector.load %arg15[%c0_44, %c0_45] : memref<4x1xf32, #tpu.memory_space<vmem>>, vector<4x1xf32>
    %94 = vector.broadcast %93 : vector<4x1xf32> to vector<4x384xf32>
    %95 = arith.mulf %92, %94 : vector<4x384xf32>
    %c0_46 = arith.constant 0 : index
    %c0_47 = arith.constant 0 : index
    %96 = vector.load %arg16[%c0_46, %c0_47] : memref<4x1xf32, #tpu.memory_space<vmem>>, vector<4x1xf32>
    %97 = vector.broadcast %96 : vector<4x1xf32> to vector<4x384xf32>
    %98 = arith.addf %95, %97 : vector<4x384xf32>
    %cst_48 = arith.constant 0.000000e+00 : f32
    %99 = vector.broadcast %cst_48 : f32 to vector<4x384xf32>
    %100 = arith.maximumf %98, %99 : vector<4x384xf32>
    %101 = vector.extract_strided_slice %79 {offsets = [0, 78], sizes = [8, 384], strides = [1, 1]} : vector<8x640xf32> to vector<8x384xf32>
    %102 = vector.extract_strided_slice %79 {offsets = [0, 80], sizes = [8, 384], strides = [1, 1]} : vector<8x640xf32> to vector<8x384xf32>
    %103 = vector.extract_strided_slice %79 {offsets = [0, 82], sizes = [8, 384], strides = [1, 1]} : vector<8x640xf32> to vector<8x384xf32>
    %104 = vector.extract_strided_slice %79 {offsets = [0, 126], sizes = [8, 384], strides = [1, 1]} : vector<8x640xf32> to vector<8x384xf32>
    %105 = vector.extract_strided_slice %79 {offsets = [0, 128], sizes = [8, 384], strides = [1, 1]} : vector<8x640xf32> to vector<8x384xf32>
    %106 = vector.extract_strided_slice %79 {offsets = [0, 130], sizes = [8, 384], strides = [1, 1]} : vector<8x640xf32> to vector<8x384xf32>
    %107 = vector.extract_strided_slice %79 {offsets = [0, 174], sizes = [8, 384], strides = [1, 1]} : vector<8x640xf32> to vector<8x384xf32>
    %108 = vector.extract_strided_slice %79 {offsets = [0, 176], sizes = [8, 384], strides = [1, 1]} : vector<8x640xf32> to vector<8x384xf32>
    %109 = vector.extract_strided_slice %79 {offsets = [0, 178], sizes = [8, 384], strides = [1, 1]} : vector<8x640xf32> to vector<8x384xf32>
    %110 = tpu.concatenate %101, %102, %103, %104, %105, %106, %107, %108, %109 in 0 : vector<8x384xf32>, vector<8x384xf32>, vector<8x384xf32>, vector<8x384xf32>, vector<8x384xf32>, vector<8x384xf32>, vector<8x384xf32>, vector<8x384xf32>, vector<8x384xf32> -> vector<72x384xf32>
    %111 = arith.truncf %110 : vector<72x384xf32> to vector<72x384xbf16>
    %c0_49 = arith.constant 0 : index
    %c0_50 = arith.constant 0 : index
    %112 = vector.load %arg14[%c0_49, %c0_50] : memref<4x72xbf16, #tpu.memory_space<vmem>>, vector<4x72xbf16>
    %cst_51 = arith.constant dense<0.000000e+00> : vector<4x384xf32>
    %113 = tpu.matmul %112, %111, %cst_51 {dimension_numbers = #tpu.dot_dimension_numbers<[1], [0], [0], [1], [0, 0, 1, 1], [], []>} : vector<4x72xbf16>, vector<72x384xbf16>, vector<4x384xf32> -> vector<4x384xf32>
    %c0_52 = arith.constant 0 : index
    %c0_53 = arith.constant 0 : index
    %114 = vector.load %arg17[%c0_52, %c0_53] : memref<4x1xf32, #tpu.memory_space<vmem>>, vector<4x1xf32>
    %115 = vector.broadcast %114 : vector<4x1xf32> to vector<4x384xf32>
    %116 = arith.mulf %113, %115 : vector<4x384xf32>
    %c0_54 = arith.constant 0 : index
    %c0_55 = arith.constant 0 : index
    %117 = vector.load %arg18[%c0_54, %c0_55] : memref<4x1xf32, #tpu.memory_space<vmem>>, vector<4x1xf32>
    %118 = vector.broadcast %117 : vector<4x1xf32> to vector<4x384xf32>
    %119 = arith.addf %116, %118 : vector<4x384xf32>
    %cst_56 = arith.constant 0.000000e+00 : f32
    %120 = vector.broadcast %cst_56 : f32 to vector<4x384xf32>
    %121 = arith.maximumf %119, %120 : vector<4x384xf32>
    %122 = arith.addf %100, %121 : vector<4x384xf32>
    %123 = vector.broadcast %0 : vector<1x384xf32> to vector<4x384xf32>
    %124 = arith.mulf %122, %123 : vector<4x384xf32>
    %cst_57 = arith.constant dense<0.000000e+00> : vector<4xf32>
    %125 = vector.multi_reduction <add>, %124, %cst_57 [1] : vector<4x384xf32> to vector<4xf32>
    %126 = vector.shape_cast %125 : vector<4xf32> to vector<4x1xf32>
    %cst_58 = arith.constant 3.906250e-03 : f32
    %127 = vector.broadcast %cst_58 : f32 to vector<4x1xf32>
    %128 = arith.mulf %126, %127 : vector<4x1xf32>
    %c0_59 = arith.constant 0 : index
    %c0_60 = arith.constant 0 : index
    %129 = vector.load %arg19[%c0_59, %c0_60] : memref<32x4xf32, #tpu.memory_space<vmem>>, vector<32x4xf32>
    %cst_61 = arith.constant dense<0.000000e+00> : vector<32x1xf32>
    %130 = tpu.matmul %129, %128, %cst_61 {dimension_numbers = #tpu.dot_dimension_numbers<[1], [0], [0], [1], [0, 0, 1, 1], [], []>} : vector<32x4xf32>, vector<4x1xf32>, vector<32x1xf32> -> vector<32x1xf32>
    %c0_62 = arith.constant 0 : index
    %c0_63 = arith.constant 0 : index
    %131 = vector.load %arg20[%c0_62, %c0_63] : memref<32x1xf32, #tpu.memory_space<vmem>>, vector<32x1xf32>
    %132 = arith.addf %130, %131 : vector<32x1xf32>
    %cst_64 = arith.constant 0.000000e+00 : f32
    %133 = vector.broadcast %cst_64 : f32 to vector<32x1xf32>
    %134 = arith.maximumf %132, %133 : vector<32x1xf32>
    %c0_65 = arith.constant 0 : index
    %c0_66 = arith.constant 0 : index
    %135 = vector.load %arg21[%c0_65, %c0_66] : memref<4x32xf32, #tpu.memory_space<vmem>>, vector<4x32xf32>
    %cst_67 = arith.constant dense<0.000000e+00> : vector<4x1xf32>
    %136 = tpu.matmul %135, %134, %cst_67 {dimension_numbers = #tpu.dot_dimension_numbers<[1], [0], [0], [1], [0, 0, 1, 1], [], []>} : vector<4x32xf32>, vector<32x1xf32>, vector<4x1xf32> -> vector<4x1xf32>
    %c0_68 = arith.constant 0 : index
    %c0_69 = arith.constant 0 : index
    %137 = vector.load %arg22[%c0_68, %c0_69] : memref<4x32xf32, #tpu.memory_space<vmem>>, vector<4x32xf32>
    %cst_70 = arith.constant dense<0.000000e+00> : vector<4x1xf32>
    %138 = tpu.matmul %137, %134, %cst_70 {dimension_numbers = #tpu.dot_dimension_numbers<[1], [0], [0], [1], [0, 0, 1, 1], [], []>} : vector<4x32xf32>, vector<32x1xf32>, vector<4x1xf32> -> vector<4x1xf32>
    %139 = arith.subf %138, %136 : vector<4x1xf32>
    %140 = math.exp %139 : vector<4x1xf32>
    %cst_71 = arith.constant 1.000000e+00 : f32
    %141 = vector.broadcast %cst_71 : f32 to vector<4x1xf32>
    %142 = arith.addf %141, %140 : vector<4x1xf32>
    %143 = tpu.reciprocal %142 {approx = true} : vector<4x1xf32> -> vector<4x1xf32>
    %144 = vector.broadcast %143 : vector<4x1xf32> to vector<4x384xf32>
    %145 = arith.mulf %100, %144 : vector<4x384xf32>
    %cst_72 = arith.constant 1.000000e+00 : f32
    %146 = vector.broadcast %cst_72 : f32 to vector<4x1xf32>
    %147 = arith.subf %146, %143 : vector<4x1xf32>
    %148 = vector.broadcast %147 : vector<4x1xf32> to vector<4x384xf32>
    %149 = arith.mulf %121, %148 : vector<4x384xf32>
    %150 = arith.addf %145, %149 : vector<4x384xf32>
    %c0_73 = arith.constant 0 : index
    %c0_74 = arith.constant 0 : index
    %c0_75 = arith.constant 0 : index
    %151 = vector.load %arg23[%c0_73, %c0_74, %c0_75] : memref<1x4x384xf32, #tpu.memory_space<vmem>>, vector<1x4x384xf32>
    %152 = vector.shape_cast %151 : vector<1x4x384xf32> to vector<4x384xf32>
    %153 = vector.shape_cast %150 : vector<4x384xf32> to vector<1x4x384xf32>
    tpu.vector_store %arg23[%c0_73, %c0_74, %c0_75], %153 {strides = array<i32>} : memref<1x4x384xf32, #tpu.memory_space<vmem>>, vector<1x4x384xf32>,
    return
  }
  func.func @transform_0(%arg0: i32) -> (i32, i32, i32) {
    %c0_i32 = arith.constant 0 : i32
    %c0_i32_0 = arith.constant 0 : i32
    %c0_i32_1 = arith.constant 0 : i32
    return %arg0, %c0_i32, %c0_i32_0 : i32, i32, i32
  }
  func.func @transform_1(%arg0: i32) -> (i32, i32) {
    %c0_i32 = arith.constant 0 : i32
    %c0_i32_0 = arith.constant 0 : i32
    %c0_i32_1 = arith.constant 0 : i32
    return %c0_i32, %c0_i32_0 : i32, i32
  }
  func.func @transform_2(%arg0: i32) -> (i32, i32) {
    %c0_i32 = arith.constant 0 : i32
    %c0_i32_0 = arith.constant 0 : i32
    %c0_i32_1 = arith.constant 0 : i32
    return %c0_i32, %c0_i32_0 : i32, i32
  }
  func.func @transform_3(%arg0: i32) -> (i32, i32) {
    %c0_i32 = arith.constant 0 : i32
    %c0_i32_0 = arith.constant 0 : i32
    %c0_i32_1 = arith.constant 0 : i32
    return %c0_i32, %c0_i32_0 : i32, i32
  }
  func.func @transform_4(%arg0: i32) -> (i32, i32) {
    %c0_i32 = arith.constant 0 : i32
    %c0_i32_0 = arith.constant 0 : i32
    %c0_i32_1 = arith.constant 0 : i32
    return %c0_i32, %c0_i32_0 : i32, i32
  }
  func.func @transform_5(%arg0: i32) -> (i32, i32) {
    %c0_i32 = arith.constant 0 : i32
    %c0_i32_0 = arith.constant 0 : i32
    %c0_i32_1 = arith.constant 0 : i32
    return %c0_i32, %c0_i32_0 : i32, i32
  }
  func.func @transform_6(%arg0: i32) -> (i32, i32) {
    %c0_i32 = arith.constant 0 : i32
    %c0_i32_0 = arith.constant 0 : i32
    %c0_i32_1 = arith.constant 0 : i32
    return %c0_i32, %c0_i32_0 : i32, i32
  }
  func.func @transform_7(%arg0: i32) -> (i32, i32) {
    %c0_i32 = arith.constant 0 : i32
    %c0_i32_0 = arith.constant 0 : i32
    %c0_i32_1 = arith.constant 0 : i32
    return %c0_i32, %c0_i32_0 : i32, i32
  }
  func.func @transform_8(%arg0: i32) -> (i32, i32) {
    %c0_i32 = arith.constant 0 : i32
    %c0_i32_0 = arith.constant 0 : i32
    %c0_i32_1 = arith.constant 0 : i32
    return %c0_i32, %c0_i32_0 : i32, i32
  }
  func.func @transform_9(%arg0: i32) -> (i32, i32) {
    %c0_i32 = arith.constant 0 : i32
    %c0_i32_0 = arith.constant 0 : i32
    %c0_i32_1 = arith.constant 0 : i32
    return %c0_i32, %c0_i32_0 : i32, i32
  }
  func.func @transform_10(%arg0: i32) -> (i32, i32) {
    %c0_i32 = arith.constant 0 : i32
    %c0_i32_0 = arith.constant 0 : i32
    %c0_i32_1 = arith.constant 0 : i32
    return %c0_i32, %c0_i32_0 : i32, i32
  }
  func.func @transform_11(%arg0: i32) -> (i32, i32) {
    %c0_i32 = arith.constant 0 : i32
    %c0_i32_0 = arith.constant 0 : i32
    %c0_i32_1 = arith.constant 0 : i32
    return %c0_i32, %c0_i32_0 : i32, i32
  }
  func.func @transform_12(%arg0: i32) -> (i32, i32) {
    %c0_i32 = arith.constant 0 : i32
    %c0_i32_0 = arith.constant 0 : i32
    %c0_i32_1 = arith.constant 0 : i32
    return %c0_i32, %c0_i32_0 : i32, i32
  }
  func.func @transform_13(%arg0: i32) -> (i32, i32) {
    %c0_i32 = arith.constant 0 : i32
    %c0_i32_0 = arith.constant 0 : i32
    %c0_i32_1 = arith.constant 0 : i32
    return %c0_i32, %c0_i32_0 : i32, i32
  }
  func.func @transform_14(%arg0: i32) -> (i32, i32) {
    %c0_i32 = arith.constant 0 : i32
    %c0_i32_0 = arith.constant 0 : i32
    %c0_i32_1 = arith.constant 0 : i32
    return %c0_i32, %c0_i32_0 : i32, i32
  }
  func.func @transform_15(%arg0: i32) -> (i32, i32) {
    %c0_i32 = arith.constant 0 : i32
    %c0_i32_0 = arith.constant 0 : i32
    %c0_i32_1 = arith.constant 0 : i32
    return %c0_i32, %c0_i32_0 : i32, i32
  }
  func.func @transform_16(%arg0: i32) -> (i32, i32) {
    %c0_i32 = arith.constant 0 : i32
    %c0_i32_0 = arith.constant 0 : i32
    %c0_i32_1 = arith.constant 0 : i32
    return %c0_i32, %c0_i32_0 : i32, i32
  }
  func.func @transform_17(%arg0: i32) -> (i32, i32) {
    %c0_i32 = arith.constant 0 : i32
    %c0_i32_0 = arith.constant 0 : i32
    %c0_i32_1 = arith.constant 0 : i32
    return %c0_i32, %c0_i32_0 : i32, i32
  }
  func.func @transform_18(%arg0: i32) -> (i32, i32) {
    %c0_i32 = arith.constant 0 : i32
    %c0_i32_0 = arith.constant 0 : i32
    %c0_i32_1 = arith.constant 0 : i32
    return %c0_i32, %c0_i32_0 : i32, i32
  }
  func.func @transform_19(%arg0: i32) -> (i32, i32) {
    %c0_i32 = arith.constant 0 : i32
    %c0_i32_0 = arith.constant 0 : i32
    %c0_i32_1 = arith.constant 0 : i32
    return %c0_i32, %c0_i32_0 : i32, i32
  }
  func.func @transform_20(%arg0: i32) -> (i32, i32) {
    %c0_i32 = arith.constant 0 : i32
    %c0_i32_0 = arith.constant 0 : i32
    %c0_i32_1 = arith.constant 0 : i32
    return %c0_i32, %c0_i32_0 : i32, i32
  }
  func.func @transform_21(%arg0: i32) -> (i32, i32) {
    %c0_i32 = arith.constant 0 : i32
    %c0_i32_0 = arith.constant 0 : i32
    %c0_i32_1 = arith.constant 0 : i32
    return %c0_i32, %c0_i32_0 : i32, i32
  }
  func.func @transform_22(%arg0: i32) -> (i32, i32, i32) {
    %c0_i32 = arith.constant 0 : i32
    %c0_i32_0 = arith.constant 0 : i32
    %c0_i32_1 = arith.constant 0 : i32
    return %arg0, %c0_i32, %c0_i32_0 : i32, i32, i32
  }
}

</mosaic_0001>

<llo_original>
// kernel: up1_forward.1
$region0: #{up1_forward.1}
  #allocation0 [shape = 'u32[]', space=smem, size = 0x4, offset = 0x4, fixed_abs, tag = 'smem constant byte address 0x4 - core index']
  #allocation1 [shape = 'u32[144,128]{1,0:T(1,128)}', space=vmem, size = 0x12000, scoped, tag = 'internal scratch']
  #allocation2 [shape = 'f32[8,640]{1,0:T(8,128)}', space=vmem, size = 0x5000, scoped, tag = 'scratch operand']
  %s0 = inlined_call_operand.vmem [shape: f32[2,8,640], index: 0, kind: input, shape index: {}]
  %s1 = inlined_call_operand.vmem [shape: f32[1,384], index: 1, kind: input, shape index: {}]
  %s2 = inlined_call_operand.vmem [shape: bf16[4,72], index: 2, kind: input, shape index: {}]
  %s3 = inlined_call_operand.vmem [shape: bf16[4,72], index: 3, kind: input, shape index: {}]
  %s4 = inlined_call_operand.vmem [shape: f32[4,1], index: 4, kind: input, shape index: {}]
  %s5 = inlined_call_operand.vmem [shape: f32[4,1], index: 5, kind: input, shape index: {}]
  %s6 = inlined_call_operand.vmem [shape: f32[4,1], index: 6, kind: input, shape index: {}]
  %s7 = inlined_call_operand.vmem [shape: f32[4,1], index: 7, kind: input, shape index: {}]
  %s8 = inlined_call_operand.vmem [shape: f32[32,4], index: 8, kind: input, shape index: {}]
  %s9 = inlined_call_operand.vmem [shape: f32[32,1], index: 9, kind: input, shape index: {}]
  %s10 = inlined_call_operand.vmem [shape: f32[4,32], index: 10, kind: input, shape index: {}]
  %s11 = inlined_call_operand.vmem [shape: f32[4,32], index: 11, kind: input, shape index: {}]
  %s12 = inlined_call_operand.vmem [shape: bf16[4,72], index: 12, kind: input, shape index: {}]
  %s13 = inlined_call_operand.vmem [shape: bf16[4,72], index: 13, kind: input, shape index: {}]
  %s14 = inlined_call_operand.vmem [shape: f32[4,1], index: 14, kind: input, shape index: {}]
  %s15 = inlined_call_operand.vmem [shape: f32[4,1], index: 15, kind: input, shape index: {}]
  %s16 = inlined_call_operand.vmem [shape: f32[4,1], index: 16, kind: input, shape index: {}]
  %s17 = inlined_call_operand.vmem [shape: f32[4,1], index: 17, kind: input, shape index: {}]
  %s18 = inlined_call_operand.vmem [shape: f32[32,4], index: 18, kind: input, shape index: {}]
  %s19 = inlined_call_operand.vmem [shape: f32[32,1], index: 19, kind: input, shape index: {}]
  %s20 = inlined_call_operand.vmem [shape: f32[4,32], index: 20, kind: input, shape index: {}]
  %s21 = inlined_call_operand.vmem [shape: f32[4,32], index: 21, kind: input, shape index: {}]
  %s22 = inlined_call_operand.vmem [shape: f32[2,4,384], index: 22, kind: output, shape index: {}]
  %s23 = sld [smem:[#allocation0]]
  $region121: #{up1_forward.1} parent=0
    _
  %s25 = ssub.s32 1, %s23
  %s26 = scalar_select 0, %s25, %s23
  loop: start=0, step=1, limit=4
  $region2: #{up1_forward.1} parent=0 // loop_pre_header
    _
  $region3: #{up1_forward.1} parent=0 // loop_header
    %s28 = sphi 0, %s32
    %p29 = scmp.ge.s32.totalorder %s28, 4
    %s38 = sphi 0, %s40
    %s41 = sphi 0, %s38
    %s42 = sphi 0, %s41
    %s58 = sphi 0, %s42
    %s62 = sphi 0, %s62
    %s64 = sphi 0, %s62
    %s65 = sphi 0, %s64
    %s79 = sphi 0, %s65
    %s83 = sphi 0, %s83
    %s85 = sphi 0, %s83
    %s86 = sphi 0, %s85
    %s100 = sphi 0, %s86
    %s104 = sphi 0, %s104
    %s106 = sphi 0, %s104
    %s107 = sphi 0, %s106
    %s121 = sphi 0, %s107
    %s125 = sphi 0, %s125
    %s127 = sphi 0, %s125
    %s128 = sphi 0, %s127
    %s142 = sphi 0, %s128
    %s146 = sphi 0, %s146
    %s148 = sphi 0, %s146
    %s149 = sphi 0, %s148
    %s163 = sphi 0, %s149
    %s167 = sphi 0, %s167
    %s169 = sphi 0, %s167
    %s170 = sphi 0, %s169
    %s184 = sphi 0, %s170
    %s188 = sphi 0, %s188
    %s190 = sphi 0, %s188
    %s191 = sphi 0, %s190
    %s205 = sphi 0, %s191
    %s209 = sphi 0, %s209
    %s211 = sphi 0, %s209
    %s212 = sphi 0, %s211
    %s226 = sphi 0, %s212
    %s230 = sphi 0, %s230
    %s232 = sphi 0, %s230
    %s233 = sphi 0, %s232
    %s247 = sphi 0, %s233
    %s251 = sphi 0, %s251
    %s253 = sphi 0, %s251
    %s254 = sphi 0, %s253
    %s268 = sphi 0, %s254
    %s272 = sphi 0, %s272
    %s274 = sphi 0, %s272
    %s275 = sphi 0, %s274
    %s289 = sphi 0, %s275
    %s293 = sphi 0, %s293
    %s295 = sphi 0, %s293
    %s296 = sphi 0, %s295
    %s310 = sphi 0, %s296
    %s314 = sphi 0, %s314
    %s316 = sphi 0, %s314
    %s317 = sphi 0, %s316
    %s331 = sphi 0, %s317
    %s335 = sphi 0, %s335
    %s337 = sphi 0, %s335
    %s338 = sphi 0, %s337
    %s352 = sphi 0, %s338
    %s356 = sphi 0, %s356
    %s358 = sphi 0, %s356
    %s359 = sphi 0, %s358
    %s373 = sphi 0, %s359
    %s377 = sphi 0, %s377
    %s379 = sphi 0, %s377
    %s380 = sphi 0, %s379
    %s394 = sphi 0, %s380
    %s398 = sphi 0, %s398
    %s400 = sphi 0, %s398
    %s401 = sphi 0, %s400
    %s415 = sphi 0, %s401
    %s419 = sphi 0, %s419
    %s421 = sphi 0, %s419
    %s422 = sphi 0, %s421
    %s436 = sphi 0, %s422
    %s440 = sphi 0, %s440
    %s442 = sphi 0, %s440
    %s443 = sphi 0, %s442
    %s457 = sphi 0, %s443
    %s461 = sphi 0, %s461
    %s463 = sphi 0, %s461
    %s464 = sphi 0, %s463
    %s478 = sphi 0, %s464
    %s482 = sphi 0, %s482
    %s484 = sphi 0, %s482
    %s485 = sphi 0, %s484
    %s499 = sphi 0, %s485
    %s505 = sphi 0, %s507
    %s508 = sphi 0, %s505
    %s509 = sphi 0, %s508
    %s525 = sphi 0, %s509
  $region4: #{up1_forward.1} parent=0 // loop_header_branch
    %31 = sbr.rel (%p29) target = $region8
  $region5: #{up1_forward.1} parent=0 // loop_body
    %s33 = ssub.s32 %s28, 1
    %s34 = ssub.s32 %s28, 2
    %s35 = sadd.s32 %s28, 1
    %s36 = ssub.s32 %s28, %s35
    %p37 = scmp.eq.s32.totalorder %s36, 0
    %s39 = sadd.s32 %s38, 1
    %s40 = scalar_select %p37, %s38, %s39
    %p43 = pneg %p37
    %p44 = scmp.eq.s32.totalorder %s28, 1
    %p45 = por %p43, %p44
    %p46 = scmp.ne.s32.totalorder %s38, %s41
    %p47 = scmp.eq.s32.totalorder %s28, 0
    %p48 = por %p46, %p47
    %p49 = scmp.ne.s32.totalorder %s38, %s41
    %p50 = scmp.eq.s32.totalorder %s33, 1
    %p51 = por %p49, %p50
    %p52 = scmp.ne.s32.totalorder %s41, %s42
    %p53 = scmp.eq.s32.totalorder %s33, 0
    %p54 = por %p52, %p53
    %p55 = scmp.ne.s32.totalorder %s41, %s42
    %p56 = scmp.eq.s32.totalorder %s34, 1
    %p57 = por %p55, %p56
    %p59 = scmp.ne.s32.totalorder %s42, %s58
    %p60 = scmp.eq.s32.totalorder %s34, 0
    %p61 = por %p59, %p60
    %s63 = sadd.s32 %s62, 1
    %p66 = scmp.eq.s32.totalorder %s28, 1
    %p67 = scmp.ne.s32.totalorder %s62, %s64
    %p68 = scmp.eq.s32.totalorder %s28, 0
    %p69 = por %p67, %p68
    %p70 = scmp.ne.s32.totalorder %s62, %s64
    %p71 = scmp.eq.s32.totalorder %s33, 1
    %p72 = por %p70, %p71
    %p73 = scmp.ne.s32.totalorder %s64, %s65
    %p74 = scmp.eq.s32.totalorder %s33, 0
    %p75 = por %p73, %p74
    %p76 = scmp.ne.s32.totalorder %s64, %s65
    %p77 = scmp.eq.s32.totalorder %s34, 1
    %p78 = por %p76, %p77
    %p80 = scmp.ne.s32.totalorder %s65, %s79
    %p81 = scmp.eq.s32.totalorder %s34, 0
    %p82 = por %p80, %p81
    %s84 = sadd.s32 %s83, 1
    %p87 = scmp.eq.s32.totalorder %s28, 1
    %p88 = scmp.ne.s32.totalorder %s83, %s85
    %p89 = scmp.eq.s32.totalorder %s28, 0
    %p90 = por %p88, %p89
    %p91 = scmp.ne.s32.totalorder %s83, %s85
    %p92 = scmp.eq.s32.totalorder %s33, 1
    %p93 = por %p91, %p92
    %p94 = scmp.ne.s32.totalorder %s85, %s86
    %p95 = scmp.eq.s32.totalorder %s33, 0
    %p96 = por %p94, %p95
    %p97 = scmp.ne.s32.totalorder %s85, %s86
    %p98 = scmp.eq.s32.totalorder %s34, 1
    %p99 = por %p97, %p98
    %p101 = scmp.ne.s32.totalorder %s86, %s100
    %p102 = scmp.eq.s32.totalorder %s34, 0
    %p103 = por %p101, %p102
    %s105 = sadd.s32 %s104, 1
    %p108 = scmp.eq.s32.totalorder %s28, 1
    %p109 = scmp.ne.s32.totalorder %s104, %s106
    %p110 = scmp.eq.s32.totalorder %s28, 0
    %p111 = por %p109, %p110
    %p112 = scmp.ne.s32.totalorder %s104, %s106
    %p113 = scmp.eq.s32.totalorder %s33, 1
    %p114 = por %p112, %p113
    %p115 = scmp.ne.s32.totalorder %s106, %s107
    %p116 = scmp.eq.s32.totalorder %s33, 0
    %p117 = por %p115, %p116
    %p118 = scmp.ne.s32.totalorder %s106, %s107
    %p119 = scmp.eq.s32.totalorder %s34, 1
    %p120 = por %p118, %p119
    %p122 = scmp.ne.s32.totalorder %s107, %s121
    %p123 = scmp.eq.s32.totalorder %s34, 0
    %p124 = por %p122, %p123
    %s126 = sadd.s32 %s125, 1
    %p129 = scmp.eq.s32.totalorder %s28, 1
    %p130 = scmp.ne.s32.totalorder %s125, %s127
    %p131 = scmp.eq.s32.totalorder %s28, 0
    %p132 = por %p130, %p131
    %p133 = scmp.ne.s32.totalorder %s125, %s127
    %p134 = scmp.eq.s32.totalorder %s33, 1
    %p135 = por %p133, %p134
    %p136 = scmp.ne.s32.totalorder %s127, %s128
    %p137 = scmp.eq.s32.totalorder %s33, 0
    %p138 = por %p136, %p137
    %p139 = scmp.ne.s32.totalorder %s127, %s128
    %p140 = scmp.eq.s32.totalorder %s34, 1
    %p141 = por %p139, %p140
    %p143 = scmp.ne.s32.totalorder %s128, %s142
    %p144 = scmp.eq.s32.totalorder %s34, 0
    %p145 = por %p143, %p144
    %s147 = sadd.s32 %s146, 1
    %p150 = scmp.eq.s32.totalorder %s28, 1
    %p151 = scmp.ne.s32.totalorder %s146, %s148
    %p152 = scmp.eq.s32.totalorder %s28, 0
    %p153 = por %p151, %p152
    %p154 = scmp.ne.s32.totalorder %s146, %s148
    %p155 = scmp.eq.s32.totalorder %s33, 1
    %p156 = por %p154, %p155
    %p157 = scmp.ne.s32.totalorder %s148, %s149
    %p158 = scmp.eq.s32.totalorder %s33, 0
    %p159 = por %p157, %p158
    %p160 = scmp.ne.s32.totalorder %s148, %s149
    %p161 = scmp.eq.s32.totalorder %s34, 1
    %p162 = por %p160, %p161
    %p164 = scmp.ne.s32.totalorder %s149, %s163
    %p165 = scmp.eq.s32.totalorder %s34, 0
    %p166 = por %p164, %p165
    %s168 = sadd.s32 %s167, 1
    %p171 = scmp.eq.s32.totalorder %s28, 1
    %p172 = scmp.ne.s32.totalorder %s167, %s169
    %p173 = scmp.eq.s32.totalorder %s28, 0
    %p174 = por %p172, %p173
    %p175 = scmp.ne.s32.totalorder %s167, %s169
    %p176 = scmp.eq.s32.totalorder %s33, 1
    %p177 = por %p175, %p176
    %p178 = scmp.ne.s32.totalorder %s169, %s170
    %p179 = scmp.eq.s32.totalorder %s33, 0
    %p180 = por %p178, %p179
    %p181 = scmp.ne.s32.totalorder %s169, %s170
    %p182 = scmp.eq.s32.totalorder %s34, 1
    %p183 = por %p181, %p182
    %p185 = scmp.ne.s32.totalorder %s170, %s184
    %p186 = scmp.eq.s32.totalorder %s34, 0
    %p187 = por %p185, %p186
    %s189 = sadd.s32 %s188, 1
    %p192 = scmp.eq.s32.totalorder %s28, 1
    %p193 = scmp.ne.s32.totalorder %s188, %s190
    %p194 = scmp.eq.s32.totalorder %s28, 0
    %p195 = por %p193, %p194
    %p196 = scmp.ne.s32.totalorder %s188, %s190
    %p197 = scmp.eq.s32.totalorder %s33, 1
    %p198 = por %p196, %p197
    %p199 = scmp.ne.s32.totalorder %s190, %s191
    %p200 = scmp.eq.s32.totalorder %s33, 0
    %p201 = por %p199, %p200
    %p202 = scmp.ne.s32.totalorder %s190, %s191
    %p203 = scmp.eq.s32.totalorder %s34, 1
    %p204 = por %p202, %p203
    %p206 = scmp.ne.s32.totalorder %s191, %s205
    %p207 = scmp.eq.s32.totalorder %s34, 0
    %p208 = por %p206, %p207
    %s210 = sadd.s32 %s209, 1
    %p213 = scmp.eq.s32.totalorder %s28, 1
    %p214 = scmp.ne.s32.totalorder %s209, %s211
    %p215 = scmp.eq.s32.totalorder %s28, 0
    %p216 = por %p214, %p215
    %p217 = scmp.ne.s32.totalorder %s209, %s211
    %p218 = scmp.eq.s32.totalorder %s33, 1
    %p219 = por %p217, %p218
    %p220 = scmp.ne.s32.totalorder %s211, %s212
    %p221 = scmp.eq.s32.totalorder %s33, 0
    %p222 = por %p220, %p221
    %p223 = scmp.ne.s32.totalorder %s211, %s212
    %p224 = scmp.eq.s32.totalorder %s34, 1
    %p225 = por %p223, %p224
    %p227 = scmp.ne.s32.totalorder %s212, %s226
    %p228 = scmp.eq.s32.totalorder %s34, 0
    %p229 = por %p227, %p228
    %s231 = sadd.s32 %s230, 1
    %p234 = scmp.eq.s32.totalorder %s28, 1
    %p235 = scmp.ne.s32.totalorder %s230, %s232
    %p236 = scmp.eq.s32.totalorder %s28, 0
    %p237 = por %p235, %p236
    %p238 = scmp.ne.s32.totalorder %s230, %s232
    %p239 = scmp.eq.s32.totalorder %s33, 1
    %p240 = por %p238, %p239
    %p241 = scmp.ne.s32.totalorder %s232, %s233
    %p242 = scmp.eq.s32.totalorder %s33, 0
    %p243 = por %p241, %p242
    %p244 = scmp.ne.s32.totalorder %s232, %s233
    %p245 = scmp.eq.s32.totalorder %s34, 1
    %p246 = por %p244, %p245
    %p248 = scmp.ne.s32.totalorder %s233, %s247
    %p249 = scmp.eq.s32.totalorder %s34, 0
    %p250 = por %p248, %p249
    %s252 = sadd.s32 %s251, 1
    %p255 = scmp.eq.s32.totalorder %s28, 1
    %p256 = scmp.ne.s32.totalorder %s251, %s253
    %p257 = scmp.eq.s32.totalorder %s28, 0
    %p258 = por %p256, %p257
    %p259 = scmp.ne.s32.totalorder %s251, %s253
    %p260 = scmp.eq.s32.totalorder %s33, 1
    %p261 = por %p259, %p260
    %p262 = scmp.ne.s32.totalorder %s253, %s254
    %p263 = scmp.eq.s32.totalorder %s33, 0
    %p264 = por %p262, %p263
    %p265 = scmp.ne.s32.totalorder %s253, %s254
    %p266 = scmp.eq.s32.totalorder %s34, 1
    %p267 = por %p265, %p266
    %p269 = scmp.ne.s32.totalorder %s254, %s268
    %p270 = scmp.eq.s32.totalorder %s34, 0
    %p271 = por %p269, %p270
    %s273 = sadd.s32 %s272, 1
    %p276 = scmp.eq.s32.totalorder %s28, 1
    %p277 = scmp.ne.s32.totalorder %s272, %s274
    %p278 = scmp.eq.s32.totalorder %s28, 0
    %p279 = por %p277, %p278
    %p280 = scmp.ne.s32.totalorder %s272, %s274
    %p281 = scmp.eq.s32.totalorder %s33, 1
    %p282 = por %p280, %p281
    %p283 = scmp.ne.s32.totalorder %s274, %s275
    %p284 = scmp.eq.s32.totalorder %s33, 0
    %p285 = por %p283, %p284
    %p286 = scmp.ne.s32.totalorder %s274, %s275
    %p287 = scmp.eq.s32.totalorder %s34, 1
    %p288 = por %p286, %p287
    %p290 = scmp.ne.s32.totalorder %s275, %s289
    %p291 = scmp.eq.s32.totalorder %s34, 0
    %p292 = por %p290, %p291
    %s294 = sadd.s32 %s293, 1
    %p297 = scmp.eq.s32.totalorder %s28, 1
    %p298 = scmp.ne.s32.totalorder %s293, %s295
    %p299 = scmp.eq.s32.totalorder %s28, 0
    %p300 = por %p298, %p299
    %p301 = scmp.ne.s32.totalorder %s293, %s295
    %p302 = scmp.eq.s32.totalorder %s33, 1
    %p303 = por %p301, %p302
    %p304 = scmp.ne.s32.totalorder %s295, %s296
    %p305 = scmp.eq.s32.totalorder %s33, 0
    %p306 = por %p304, %p305
    %p307 = scmp.ne.s32.totalorder %s295, %s296
    %p308 = scmp.eq.s32.totalorder %s34, 1
    %p309 = por %p307, %p308
    %p311 = scmp.ne.s32.totalorder %s296, %s310
    %p312 = scmp.eq.s32.totalorder %s34, 0
    %p313 = por %p311, %p312
    %s315 = sadd.s32 %s314, 1
    %p318 = scmp.eq.s32.totalorder %s28, 1
    %p319 = scmp.ne.s32.totalorder %s314, %s316
    %p320 = scmp.eq.s32.totalorder %s28, 0
    %p321 = por %p319, %p320
    %p322 = scmp.ne.s32.totalorder %s314, %s316
    %p323 = scmp.eq.s32.totalorder %s33, 1
    %p324 = por %p322, %p323
    %p325 = scmp.ne.s32.totalorder %s316, %s317
    %p326 = scmp.eq.s32.totalorder %s33, 0
    %p327 = por %p325, %p326
    %p328 = scmp.ne.s32.totalorder %s316, %s317
    %p329 = scmp.eq.s32.totalorder %s34, 1
    %p330 = por %p328, %p329
    %p332 = scmp.ne.s32.totalorder %s317, %s331
    %p333 = scmp.eq.s32.totalorder %s34, 0
    %p334 = por %p332, %p333
    %s336 = sadd.s32 %s335, 1
    %p339 = scmp.eq.s32.totalorder %s28, 1
    %p340 = scmp.ne.s32.totalorder %s335, %s337
    %p341 = scmp.eq.s32.totalorder %s28, 0
    %p342 = por %p340, %p341
    %p343 = scmp.ne.s32.totalorder %s335, %s337
    %p344 = scmp.eq.s32.totalorder %s33, 1
    %p345 = por %p343, %p344
    %p346 = scmp.ne.s32.totalorder %s337, %s338
    %p347 = scmp.eq.s32.totalorder %s33, 0
    %p348 = por %p346, %p347
    %p349 = scmp.ne.s32.totalorder %s337, %s338
    %p350 = scmp.eq.s32.totalorder %s34, 1
    %p351 = por %p349, %p350
    %p353 = scmp.ne.s32.totalorder %s338, %s352
    %p354 = scmp.eq.s32.totalorder %s34, 0
    %p355 = por %p353, %p354
    %s357 = sadd.s32 %s356, 1
    %p360 = scmp.eq.s32.totalorder %s28, 1
    %p361 = scmp.ne.s32.totalorder %s356, %s358
    %p362 = scmp.eq.s32.totalorder %s28, 0
    %p363 = por %p361, %p362
    %p364 = scmp.ne.s32.totalorder %s356, %s358
    %p365 = scmp.eq.s32.totalorder %s33, 1
    %p366 = por %p364, %p365
    %p367 = scmp.ne.s32.totalorder %s358, %s359
    %p368 = scmp.eq.s32.totalorder %s33, 0
    %p369 = por %p367, %p368
    %p370 = scmp.ne.s32.totalorder %s358, %s359
    %p371 = scmp.eq.s32.totalorder %s34, 1
    %p372 = por %p370, %p371
    %p374 = scmp.ne.s32.totalorder %s359, %s373
    %p375 = scmp.eq.s32.totalorder %s34, 0
    %p376 = por %p374, %p375
    %s378 = sadd.s32 %s377, 1
    %p381 = scmp.eq.s32.totalorder %s28, 1
    %p382 = scmp.ne.s32.totalorder %s377, %s379
    %p383 = scmp.eq.s32.totalorder %s28, 0
    %p384 = por %p382, %p383
    %p385 = scmp.ne.s32.totalorder %s377, %s379
    %p386 = scmp.eq.s32.totalorder %s33, 1
    %p387 = por %p385, %p386
    %p388 = scmp.ne.s32.totalorder %s379, %s380
    %p389 = scmp.eq.s32.totalorder %s33, 0
    %p390 = por %p388, %p389
    %p391 = scmp.ne.s32.totalorder %s379, %s380
    %p392 = scmp.eq.s32.totalorder %s34, 1
    %p393 = por %p391, %p392
    %p395 = scmp.ne.s32.totalorder %s380, %s394
    %p396 = scmp.eq.s32.totalorder %s34, 0
    %p397 = por %p395, %p396
    %s399 = sadd.s32 %s398, 1
    %p402 = scmp.eq.s32.totalorder %s28, 1
    %p403 = scmp.ne.s32.totalorder %s398, %s400
    %p404 = scmp.eq.s32.totalorder %s28, 0
    %p405 = por %p403, %p404
    %p406 = scmp.ne.s32.totalorder %s398, %s400
    %p407 = scmp.eq.s32.totalorder %s33, 1
    %p408 = por %p406, %p407
    %p409 = scmp.ne.s32.totalorder %s400, %s401
    %p410 = scmp.eq.s32.totalorder %s33, 0
    %p411 = por %p409, %p410
    %p412 = scmp.ne.s32.totalorder %s400, %s401
    %p413 = scmp.eq.s32.totalorder %s34, 1
    %p414 = por %p412, %p413
    %p416 = scmp.ne.s32.totalorder %s401, %s415
    %p417 = scmp.eq.s32.totalorder %s34, 0
    %p418 = por %p416, %p417
    %s420 = sadd.s32 %s419, 1
    %p423 = scmp.eq.s32.totalorder %s28, 1
    %p424 = scmp.ne.s32.totalorder %s419, %s421
    %p425 = scmp.eq.s32.totalorder %s28, 0
    %p426 = por %p424, %p425
    %p427 = scmp.ne.s32.totalorder %s419, %s421
    %p428 = scmp.eq.s32.totalorder %s33, 1
    %p429 = por %p427, %p428
    %p430 = scmp.ne.s32.totalorder %s421, %s422
    %p431 = scmp.eq.s32.totalorder %s33, 0
    %p432 = por %p430, %p431
    %p433 = scmp.ne.s32.totalorder %s421, %s422
    %p434 = scmp.eq.s32.totalorder %s34, 1
    %p435 = por %p433, %p434
    %p437 = scmp.ne.s32.totalorder %s422, %s436
    %p438 = scmp.eq.s32.totalorder %s34, 0
    %p439 = por %p437, %p438
    %s441 = sadd.s32 %s440, 1
    %p444 = scmp.eq.s32.totalorder %s28, 1
    %p445 = scmp.ne.s32.totalorder %s440, %s442
    %p446 = scmp.eq.s32.totalorder %s28, 0
    %p447 = por %p445, %p446
    %p448 = scmp.ne.s32.totalorder %s440, %s442
    %p449 = scmp.eq.s32.totalorder %s33, 1
    %p450 = por %p448, %p449
    %p451 = scmp.ne.s32.totalorder %s442, %s443
    %p452 = scmp.eq.s32.totalorder %s33, 0
    %p453 = por %p451, %p452
    %p454 = scmp.ne.s32.totalorder %s442, %s443
    %p455 = scmp.eq.s32.totalorder %s34, 1
    %p456 = por %p454, %p455
    %p458 = scmp.ne.s32.totalorder %s443, %s457
    %p459 = scmp.eq.s32.totalorder %s34, 0
    %p460 = por %p458, %p459
    %s462 = sadd.s32 %s461, 1
    %p465 = scmp.eq.s32.totalorder %s28, 1
    %p466 = scmp.ne.s32.totalorder %s461, %s463
    %p467 = scmp.eq.s32.totalorder %s28, 0
    %p468 = por %p466, %p467
    %p469 = scmp.ne.s32.totalorder %s461, %s463
    %p470 = scmp.eq.s32.totalorder %s33, 1
    %p471 = por %p469, %p470
    %p472 = scmp.ne.s32.totalorder %s463, %s464
    %p473 = scmp.eq.s32.totalorder %s33, 0
    %p474 = por %p472, %p473
    %p475 = scmp.ne.s32.totalorder %s463, %s464
    %p476 = scmp.eq.s32.totalorder %s34, 1
    %p477 = por %p475, %p476
    %p479 = scmp.ne.s32.totalorder %s464, %s478
    %p480 = scmp.eq.s32.totalorder %s34, 0
    %p481 = por %p479, %p480
    %s483 = sadd.s32 %s482, 1
    %p486 = scmp.eq.s32.totalorder %s28, 1
    %p487 = scmp.ne.s32.totalorder %s482, %s484
    %p488 = scmp.eq.s32.totalorder %s28, 0
    %p489 = por %p487, %p488
    %p490 = scmp.ne.s32.totalorder %s482, %s484
    %p491 = scmp.eq.s32.totalorder %s33, 1
    %p492 = por %p490, %p491
    %p493 = scmp.ne.s32.totalorder %s484, %s485
    %p494 = scmp.eq.s32.totalorder %s33, 0
    %p495 = por %p493, %p494
    %p496 = scmp.ne.s32.totalorder %s484, %s485
    %p497 = scmp.eq.s32.totalorder %s34, 1
    %p498 = por %p496, %p497
    %p500 = scmp.ne.s32.totalorder %s485, %s499
    %p501 = scmp.eq.s32.totalorder %s34, 0
    %p502 = por %p500, %p501
    %s503 = ssub.s32 %s28, %s35
    %p504 = scmp.eq.s32.totalorder %s503, 0
    %s506 = sadd.s32 %s505, 1
    %s507 = scalar_select %p504, %s505, %s506
    %p510 = pneg %p504
    %p511 = scmp.eq.s32.totalorder %s28, 1
    %p512 = por %p510, %p511
    %p513 = scmp.ne.s32.totalorder %s505, %s508
    %p514 = scmp.eq.s32.totalorder %s28, 0
    %p515 = por %p513, %p514
    %p516 = scmp.ne.s32.totalorder %s505, %s508
    %p517 = scmp.eq.s32.totalorder %s33, 1
    %p518 = por %p516, %p517
    %p519 = scmp.ne.s32.totalorder %s508, %s509
    %p520 = scmp.eq.s32.totalorder %s33, 0
    %p521 = por %p519, %p520
    %p522 = scmp.ne.s32.totalorder %s508, %s509
    %p523 = scmp.eq.s32.totalorder %s34, 1
    %p524 = por %p522, %p523
    %p526 = scmp.ne.s32.totalorder %s509, %s525
    %p527 = scmp.eq.s32.totalorder %s34, 0
    %p528 = por %p526, %p527
    %p529 = scmp.le.s32.totalorder 1, %s28
    %p530 = scmp.lt.s32.totalorder %s28, 3
    %p531 = pnand %p529, %p530
    %p532 = pneg %p531
    // Predicated region
    $region9: #{up1_forward.1} parent=5 // pred_check
      _
    $region10: #{up1_forward.1} parent=5 // pred_check_branch
      %534 = sbr.rel (%p531) target = $region12
    $region11: #{up1_forward.1} parent=5 // pred_region
      %s535 = ssub.s32 %s28, 1
      // Predicated region
      $region13: #{up1_forward.1} parent=11 // pred_check
        %p536 = pneg %p75
      $region14: #{up1_forward.1} parent=11 // pred_check_branch
        %538 = sbr.rel (%p536) target = $region16
      $region15: #{up1_forward.1} parent=11 // pred_region
        _
      $region16: #{up1_forward.1} parent=11 // pred_fallthru
        _
      // Predicated region
      $region17: #{up1_forward.1} parent=11 // pred_check
        %p539 = pneg %p96
      $region18: #{up1_forward.1} parent=11 // pred_check_branch
        %541 = sbr.rel (%p539) target = $region20
      $region19: #{up1_forward.1} parent=11 // pred_region
        _
      $region20: #{up1_forward.1} parent=11 // pred_fallthru
        _
      // Predicated region
      $region21: #{up1_forward.1} parent=11 // pred_check
        %p542 = pneg %p117
      $region22: #{up1_forward.1} parent=11 // pred_check_branch
        %544 = sbr.rel (%p542) target = $region24
      $region23: #{up1_forward.1} parent=11 // pred_region
        _
      $region24: #{up1_forward.1} parent=11 // pred_fallthru
        _
      // Predicated region
      $region25: #{up1_forward.1} parent=11 // pred_check
        %p545 = pneg %p138
      $region26: #{up1_forward.1} parent=11 // pred_check_branch
        %547 = sbr.rel (%p545) target = $region28
      $region27: #{up1_forward.1} parent=11 // pred_region
        _
      $region28: #{up1_forward.1} parent=11 // pred_fallthru
        _
      // Predicated region
      $region29: #{up1_forward.1} parent=11 // pred_check
        %p548 = pneg %p159
      $region30: #{up1_forward.1} parent=11 // pred_check_branch
        %550 = sbr.rel (%p548) target = $region32
      $region31: #{up1_forward.1} parent=11 // pred_region
        _
      $region32: #{up1_forward.1} parent=11 // pred_fallthru
        _
      // Predicated region
      $region33: #{up1_forward.1} parent=11 // pred_check
        %p551 = pneg %p180
      $region34: #{up1_forward.1} parent=11 // pred_check_branch
        %553 = sbr.rel (%p551) target = $region36
      $region35: #{up1_forward.1} parent=11 // pred_region
        _
      $region36: #{up1_forward.1} parent=11 // pred_fallthru
        _
      // Predicated region
      $region37: #{up1_forward.1} parent=11 // pred_check
        %p554 = pneg %p201
      $region38: #{up1_forward.1} parent=11 // pred_check_branch
        %556 = sbr.rel (%p554) target = $region40
      $region39: #{up1_forward.1} parent=11 // pred_region
        _
      $region40: #{up1_forward.1} parent=11 // pred_fallthru
        _
      // Predicated region
      $region41: #{up1_forward.1} parent=11 // pred_check
        %p557 = pneg %p222
      $region42: #{up1_forward.1} parent=11 // pred_check_branch
        %559 = sbr.rel (%p557) target = $region44
      $region43: #{up1_forward.1} parent=11 // pred_region
        _
      $region44: #{up1_forward.1} parent=11 // pred_fallthru
        _
      // Predicated region
      $region45: #{up1_forward.1} parent=11 // pred_check
        %p560 = pneg %p243
      $region46: #{up1_forward.1} parent=11 // pred_check_branch
        %562 = sbr.rel (%p560) target = $region48
      $region47: #{up1_forward.1} parent=11 // pred_region
        _
      $region48: #{up1_forward.1} parent=11 // pred_fallthru
        _
      // Predicated region
      $region49: #{up1_forward.1} parent=11 // pred_check
        %p563 = pneg %p264
      $region50: #{up1_forward.1} parent=11 // pred_check_branch
        %565 = sbr.rel (%p563) target = $region52
      $region51: #{up1_forward.1} parent=11 // pred_region
        _
      $region52: #{up1_forward.1} parent=11 // pred_fallthru
        _
      // Predicated region
      $region53: #{up1_forward.1} parent=11 // pred_check
        %p566 = pneg %p285
      $region54: #{up1_forward.1} parent=11 // pred_check_branch
        %568 = sbr.rel (%p566) target = $region56
      $region55: #{up1_forward.1} parent=11 // pred_region
        _
      $region56: #{up1_forward.1} parent=11 // pred_fallthru
        _
      // Predicated region
      $region57: #{up1_forward.1} parent=11 // pred_check
        %p569 = pneg %p306
      $region58: #{up1_forward.1} parent=11 // pred_check_branch
        %571 = sbr.rel (%p569) target = $region60
      $region59: #{up1_forward.1} parent=11 // pred_region
        _
      $region60: #{up1_forward.1} parent=11 // pred_fallthru
        _
      // Predicated region
      $region61: #{up1_forward.1} parent=11 // pred_check
        %p572 = pneg %p327
      $region62: #{up1_forward.1} parent=11 // pred_check_branch
        %574 = sbr.rel (%p572) target = $region64
      $region63: #{up1_forward.1} parent=11 // pred_region
        _
      $region64: #{up1_forward.1} parent=11 // pred_fallthru
        _
      // Predicated region
      $region65: #{up1_forward.1} parent=11 // pred_check
        %p575 = pneg %p348
      $region66: #{up1_forward.1} parent=11 // pred_check_branch
        %577 = sbr.rel (%p575) target = $region68
      $region67: #{up1_forward.1} parent=11 // pred_region
        _
      $region68: #{up1_forward.1} parent=11 // pred_fallthru
        _
      // Predicated region
      $region69: #{up1_forward.1} parent=11 // pred_check
        %p578 = pneg %p369
      $region70: #{up1_forward.1} parent=11 // pred_check_branch
        %580 = sbr.rel (%p578) target = $region72
      $region71: #{up1_forward.1} parent=11 // pred_region
        _
      $region72: #{up1_forward.1} parent=11 // pred_fallthru
        _
      // Predicated region
      $region73: #{up1_forward.1} parent=11 // pred_check
        %p581 = pneg %p390
      $region74: #{up1_forward.1} parent=11 // pred_check_branch
        %583 = sbr.rel (%p581) target = $region76
      $region75: #{up1_forward.1} parent=11 // pred_region
        _
      $region76: #{up1_forward.1} parent=11 // pred_fallthru
        _
      // Predicated region
      $region77: #{up1_forward.1} parent=11 // pred_check
        %p584 = pneg %p411
      $region78: #{up1_forward.1} parent=11 // pred_check_branch
        %586 = sbr.rel (%p584) target = $region80
      $region79: #{up1_forward.1} parent=11 // pred_region
        _
      $region80: #{up1_forward.1} parent=11 // pred_fallthru
        _
      // Predicated region
      $region81: #{up1_forward.1} parent=11 // pred_check
        %p587 = pneg %p432
      $region82: #{up1_forward.1} parent=11 // pred_check_branch
        %589 = sbr.rel (%p587) target = $region84
      $region83: #{up1_forward.1} parent=11 // pred_region
        _
      $region84: #{up1_forward.1} parent=11 // pred_fallthru
        _
      // Predicated region
      $region85: #{up1_forward.1} parent=11 // pred_check
        %p590 = pneg %p453
      $region86: #{up1_forward.1} parent=11 // pred_check_branch
        %592 = sbr.rel (%p590) target = $region88
      $region87: #{up1_forward.1} parent=11 // pred_region
        _
      $region88: #{up1_forward.1} parent=11 // pred_fallthru
        _
      // Predicated region
      $region89: #{up1_forward.1} parent=11 // pred_check
        %p593 = pneg %p474
      $region90: #{up1_forward.1} parent=11 // pred_check_branch
        %595 = sbr.rel (%p593) target = $region92
      $region91: #{up1_forward.1} parent=11 // pred_region
        _
      $region92: #{up1_forward.1} parent=11 // pred_fallthru
        _
      // Predicated region
      $region93: #{up1_forward.1} parent=11 // pred_check
        %p596 = pneg %p495
      $region94: #{up1_forward.1} parent=11 // pred_check_branch
        %598 = sbr.rel (%p596) target = $region96
      $region95: #{up1_forward.1} parent=11 // pred_region
        _
      $region96: #{up1_forward.1} parent=11 // pred_fallthru
        _
    $region12: #{up1_forward.1} parent=5 // pred_fallthru
      _
    %p599 = scmp.lt.s32.totalorder %s28, 2
    // Predicated region
    $region97: #{up1_forward.1} parent=5 // pred_check
      %p600 = pneg %p599
    $region98: #{up1_forward.1} parent=5 // pred_check_branch
      %602 = sbr.rel (%p600) target = $region100
    $region99: #{up1_forward.1} parent=5 // pred_region
      // Predicated region
      $region101: #{up1_forward.1} parent=99 // pred_check
        %p603 = pneg %p48
      $region102: #{up1_forward.1} parent=99 // pred_check_branch
        %605 = sbr.rel (%p603) target = $region104
      $region103: #{up1_forward.1} parent=99 // pred_region
        %p606 = scmp.lt.s32.totalorder %s28, 1
        %s607 = scalar_select %p606, %s28, 1
        %s608 = smul.addr %s607, 5
        %s609 = smul.addr %s608, 8
        %s610 = scalar_lea.vmem %s0, %s609
      $region104: #{up1_forward.1} parent=99 // pred_fallthru
        _
    $region100: #{up1_forward.1} parent=5 // pred_fallthru
      _
    %p611 = scmp.le.s32.totalorder 1, %s28
    %p612 = scmp.lt.s32.totalorder %s28, 3
    %p613 = pnand %p611, %p612
    %p614 = pneg %p613
    // Predicated region
    $region105: #{up1_forward.1} parent=5 // pred_check
      _
    $region106: #{up1_forward.1} parent=5 // pred_check_branch
      %616 = sbr.rel (%p613) target = $region108
    $region107: #{up1_forward.1} parent=5 // pred_region
      %s617 = ssub.s32 %s28, 1
      %p618 = scmp.lt.s32.totalorder %s33, 1
      %s619 = scalar_select %p618, %s33, 1
      %s620 = smul.addr %s619, 5
      %s621 = smul.addr %s620, 8
      %s622 = scalar_lea.vmem %s0, %s621
      %p623 = pneg %p54
      %p624 = pneg %p51
      %p625 = pneg %p75
      %p626 = pneg %p72
      %p627 = pneg %p96
      %p628 = pneg %p93
      %p629 = pneg %p117
      %p630 = pneg %p114
      %p631 = pneg %p138
      %p632 = pneg %p135
      %p633 = pneg %p159
      %p634 = pneg %p156
      %p635 = pneg %p180
      %p636 = pneg %p177
      %p637 = pneg %p201
      %p638 = pneg %p198
      %p639 = pneg %p222
      %p640 = pneg %p219
      %p641 = pneg %p243
      %p642 = pneg %p240
      %p643 = pneg %p264
      %p644 = pneg %p261
      %p645 = pneg %p285
      %p646 = pneg %p282
      %p647 = pneg %p306
      %p648 = pneg %p303
      %p649 = pneg %p327
      %p650 = pneg %p324
      %p651 = pneg %p348
      %p652 = pneg %p345
      %p653 = pneg %p369
      %p654 = pneg %p366
      %p655 = pneg %p390
      %p656 = pneg %p387
      %p657 = pneg %p411
      %p658 = pneg %p408
      %p659 = pneg %p432
      %p660 = pneg %p429
      %p661 = pneg %p453
      %p662 = pneg %p450
      %p663 = pneg %p474
      %p664 = pneg %p471
      %p665 = pneg %p495
      %p666 = pneg %p492
      %p667 = pneg %p521
      %p668 = pneg %p518
      %p669 = scmp.lt.s32.totalorder %s33, 1
      %s670 = scalar_select %p669, %s33, 1
      %s671 = smul.addr %s670, 3
      %s672 = smul.addr %s671, 4
      %s673 = scalar_lea.vmem %s22, %s672
      %p674 = scmp.lt.s32.totalorder %s33, 1
      %s675 = scalar_select %p674, %s33, 1
      %s676 = smul.addr %s675, 5
      %s677 = smul.addr %s676, 8
      %s678 = scalar_lea.vmem %s0, %s677
      %p679 = scmp.lt.s32.totalorder %s33, 1
      %s680 = scalar_select %p679, %s33, 1
      %s681 = smul.addr %s680, 3
      %s682 = smul.addr %s681, 4
      %s683 = scalar_lea.vmem %s22, %s682
      %v685 = vld [vmem:[%s1] sm:$0x7]
      %v686 = vld [vmem:[%s678] sm:$0xff]
      %v687 = vld [vmem:[%s678 + $0x8] sm:$0xff]
      %v688 = vld [vmem:[%s678 + $0x10] sm:$0xff]
      %v689 = vld [vmem:[%s678 + $0x18] sm:$0xff]
      %v690 = vld [vmem:[%s678 + $0x20] sm:$0xff]
      %695 = vrot.lane.b32.xlu0 %v686, 127
      %v696 = vpop.permute.xlu0 %695
      %697 = vrot.lane.b32.xlu0 %v687, 127
      %v698 = vpop.permute.xlu0 %697
      %699 = vrot.lane.b32.xlu0 %v688, 127
      %v700 = vpop.permute.xlu0 %699
      %701 = vrot.lane.b32.xlu0 %v689, 127
      %v702 = vpop.permute.xlu0 %701
      %vm703 = vcmask 1039360
      %v704 = vsel %vm703, %v696, %v698
      %v705 = vsel %vm703, %v698, %v700
      %v706 = vsel %vm703, %v700, %v702
      %711 = vrot.lane.b32.xlu0 %v686, 126
      %v712 = vpop.permute.xlu0 %711
      %713 = vrot.lane.b32.xlu0 %v687, 126
      %v714 = vpop.permute.xlu0 %713
      %715 = vrot.lane.b32.xlu0 %v688, 126
      %v716 = vpop.permute.xlu0 %715
      %717 = vrot.lane.b32.xlu0 %v689, 126
      %v718 = vpop.permute.xlu0 %717
      %vm719 = vcmask 1031168
      %v720 = vsel %vm719, %v712, %v714
      %v721 = vsel %vm719, %v714, %v716
      %v722 = vsel %vm719, %v716, %v718
      %727 = vrot.lane.b32.xlu0 %v686, 104
      %v728 = vpop.permute.xlu0 %727
      %729 = vrot.lane.b32.xlu0 %v687, 104
      %v730 = vpop.permute.xlu0 %729
      %731 = vrot.lane.b32.xlu0 %v688, 104
      %v732 = vpop.permute.xlu0 %731
      %733 = vrot.lane.b32.xlu0 %v689, 104
      %v734 = vpop.permute.xlu0 %733
      %vm735 = vcmask 850944
      %v736 = vsel %vm735, %v728, %v730
      %v737 = vsel %vm735, %v730, %v732
      %v738 = vsel %vm735, %v732, %v734
      %743 = vrot.lane.b32.xlu0 %v687, 103
      %v744 = vpop.permute.xlu0 %743
      %745 = vrot.lane.b32.xlu0 %v688, 103
      %v746 = vpop.permute.xlu0 %745
      %747 = vrot.lane.b32.xlu0 %v689, 103
      %v748 = vpop.permute.xlu0 %747
      %vm749 = vcmask 842752
      %v750 = vsel %vm749, %v744, %v746
      %v751 = vsel %vm749, %v746, %v748
      %757 = vrot.lane.b32.xlu0 %v687, 102
      %v758 = vpop.permute.xlu0 %757
      %759 = vrot.lane.b32.xlu0 %v688, 102
      %v760 = vpop.permute.xlu0 %759
      %761 = vrot.lane.b32.xlu0 %v689, 102
      %v762 = vpop.permute.xlu0 %761
      %763 = vrot.lane.b32.xlu0 %v690, 102
      %v764 = vpop.permute.xlu0 %763
      %vm765 = vcmask 834560
      %v766 = vsel %vm765, %v758, %v760
      %v767 = vsel %vm765, %v760, %v762
      %v768 = vsel %vm765, %v762, %v764
      %773 = vrot.lane.b32.xlu0 %v687, 80
      %v774 = vpop.permute.xlu0 %773
      %775 = vrot.lane.b32.xlu0 %v688, 80
      %v776 = vpop.permute.xlu0 %775
      %777 = vrot.lane.b32.xlu0 %v689, 80
      %v778 = vpop.permute.xlu0 %777
      %779 = vrot.lane.b32.xlu0 %v690, 80
      %v780 = vpop.permute.xlu0 %779
      %vm781 = vcmask 654336
      %v782 = vsel %vm781, %v774, %v776
      %v783 = vsel %vm781, %v776, %v778
      %v784 = vsel %vm781, %v778, %v780
      %789 = vrot.lane.b32.xlu0 %v687, 79
      %v790 = vpop.permute.xlu0 %789
      %791 = vrot.lane.b32.xlu0 %v688, 79
      %v792 = vpop.permute.xlu0 %791
      %793 = vrot.lane.b32.xlu0 %v689, 79
      %v794 = vpop.permute.xlu0 %793
      %795 = vrot.lane.b32.xlu0 %v690, 79
      %v796 = vpop.permute.xlu0 %795
      %vm797 = vcmask 646144
      %v798 = vsel %vm797, %v790, %v792
      %v799 = vsel %vm797, %v792, %v794
      %v800 = vsel %vm797, %v794, %v796
      %805 = vrot.lane.b32.xlu0 %v687, 78
      %v806 = vpop.permute.xlu0 %805
      %807 = vrot.lane.b32.xlu0 %v688, 78
      %v808 = vpop.permute.xlu0 %807
      %809 = vrot.lane.b32.xlu0 %v689, 78
      %v810 = vpop.permute.xlu0 %809
      %811 = vrot.lane.b32.xlu0 %v690, 78
      %v812 = vpop.permute.xlu0 %811
      %vm813 = vcmask 637952
      %v814 = vsel %vm813, %v806, %v808
      %v815 = vsel %vm813, %v808, %v810
      %v816 = vsel %vm813, %v810, %v812
      %v821 = vpack.c.bf16 %v704, %v686
      %v822 = vpack.c.bf16 %v705, %v687
      %v823 = vpack.c.bf16 %v706, %v688
      %v824 = vpack.c.bf16 %v702, %v689
      %v825 = vpack.c.bf16 %v736, %v720
      %v826 = vpack.c.bf16 %v737, %v721
      %v827 = vpack.c.bf16 %v738, %v722
      %v828 = vpack.c.bf16 %v734, %v718
      %v829 = vpack.c.bf16 %v758, %v744
      %v830 = vpack.c.bf16 %v766, %v750
      %v831 = vpack.c.bf16 %v767, %v751
      %v832 = vpack.c.bf16 %v768, %v748
      %v833 = vpack.c.bf16 %v790, %v774
      %v834 = vpack.c.bf16 %v798, %v782
      %v835 = vpack.c.bf16 %v799, %v783
      %v836 = vpack.c.bf16 %v800, %v784
      %v837 = vpack.c.bf16 %v806, %v806
      %v838 = vpack.c.bf16 %v814, %v814
      %v839 = vpack.c.bf16 %v815, %v815
      %v840 = vpack.c.bf16 %v816, %v816
      %v841 = vld [vmem:[%s2] sm:$0x3]
      %862 = vrot.lane.b32.xlu0 %v821, 25
      %v863 = vpop.permute.xlu0 %862
      %864 = vrot.lane.b32.xlu0 %v822, 25
      %v865 = vpop.permute.xlu0 %864
      %866 = vrot.lane.b32.xlu0 %v823, 25
      %v867 = vpop.permute.xlu0 %866
      %868 = vrot.lane.b32.xlu0 %v824, 25
      %v869 = vpop.permute.xlu0 %868
      %870 = vrot.lane.b32.xlu0 %v825, 25
      %v871 = vpop.permute.xlu0 %870
      %872 = vrot.lane.b32.xlu0 %v826, 25
      %v873 = vpop.permute.xlu0 %872
      %874 = vrot.lane.b32.xlu0 %v827, 25
      %v875 = vpop.permute.xlu0 %874
      %876 = vrot.lane.b32.xlu0 %v828, 25
      %v877 = vpop.permute.xlu0 %876
      %878 = vrot.lane.b32.xlu0 %v829, 25
      %v879 = vpop.permute.xlu0 %878
      %880 = vrot.lane.b32.xlu0 %v830, 25
      %v881 = vpop.permute.xlu0 %880
      %882 = vrot.lane.b32.xlu0 %v831, 25
      %v883 = vpop.permute.xlu0 %882
      %884 = vrot.lane.b32.xlu0 %v832, 25
      %v885 = vpop.permute.xlu0 %884
      %886 = vrot.lane.b32.xlu0 %v833, 25
      %v887 = vpop.permute.xlu0 %886
      %888 = vrot.lane.b32.xlu0 %v834, 25
      %v889 = vpop.permute.xlu0 %888
      %890 = vrot.lane.b32.xlu0 %v835, 25
      %v891 = vpop.permute.xlu0 %890
      %892 = vrot.lane.b32.xlu0 %v836, 25
      %v893 = vpop.permute.xlu0 %892
      %894 = vrot.lane.b32.xlu0 %v837, 25
      %v895 = vpop.permute.xlu0 %894
      %896 = vrot.lane.b32.xlu0 %v838, 25
      %v897 = vpop.permute.xlu0 %896
      %898 = vrot.lane.b32.xlu0 %v839, 25
      %v899 = vpop.permute.xlu0 %898
      %900 = vrot.lane.b32.xlu0 %v840, 25
      %v901 = vpop.permute.xlu0 %900
      %vm902 = vcmask 203776
      %v903 = vsel %vm902, %v863, %v865
      %v904 = vsel %vm902, %v865, %v867
      %v905 = vsel %vm902, %v867, %v869
      %v906 = vsel %vm902, %v871, %v873
      %v907 = vsel %vm902, %v873, %v875
      %v908 = vsel %vm902, %v875, %v877
      %v909 = vsel %vm902, %v879, %v881
      %v910 = vsel %vm902, %v881, %v883
      %v911 = vsel %vm902, %v883, %v885
      %v912 = vsel %vm902, %v887, %v889
      %v913 = vsel %vm902, %v889, %v891
      %v914 = vsel %vm902, %v891, %v893
      %v915 = vsel %vm902, %v895, %v897
      %v916 = vsel %vm902, %v897, %v899
      %v917 = vsel %vm902, %v899, %v901
      %vm930 = vcmask 588800
      %v932 = vsel %vm930, %v841, 0
      %vm934 = vcmask 1043456
      %v936 = vsel %vm934, %v915, 0
      %v939 = vsel %vm934, %v916, 0
      %v942 = vsel %vm934, %v917, 0
      %944 = vmatprep.subr.bf16.mxu0 %v904
      %945 = vmatpush1.bf16.msra.mxu0 %v903
      %946 = vmatprep.subr.bf16.mxu0 %v907
      %947 = vmatpush1.bf16.msra.mxu0 %v906
      %948 = vmatprep.subr.bf16.mxu0 %v910
      %949 = vmatpush1.bf16.msra.mxu0 %v909
      %950 = vmatprep.subr.bf16.mxu0 %v913
      %951 = vmatpush1.bf16.msra.mxu0 %v912
      %952 = vmatprep.subr.bf16.mxu0 %v939
      %953 = vmatpush1.bf16.msra.mxu0 %v936
      %954 = vmatprep.subr.bf16.mxu0 0
      %955 = vmatpush1.bf16.msra.mxu0 0
      %956 = vmatprep.subr.bf16.mxu0 0
      %957 = vmatpush1.bf16.msra.mxu0 0
      %958 = vmatprep.subr.bf16.mxu0 0
      %959 = vmatpush1.bf16.msra.mxu0 0
      %960 = vmatprep.subr.bf16.mxu0 0
      %961 = vmatpush1.bf16.msra.mxu0 0
      %962 = vmatprep.subr.bf16.mxu0 0
      %963 = vmatpush1.bf16.msra.mxu0 0
      %964 = vmatprep.subr.bf16.mxu0 0
      %965 = vmatpush1.bf16.msra.mxu0 0
      %966 = vmatprep.subr.bf16.mxu0 0
      %967 = vmatpush1.bf16.msra.mxu0 0
      %968 = vmatprep.subr.bf16.mxu0 0
      %969 = vmatpush1.bf16.msra.mxu0 0
      %970 = vmatprep.subr.bf16.mxu0 0
      %971 = vmatpush1.bf16.msra.mxu0 0
      %972 = vmatprep.subr.bf16.mxu0 0
      %973 = vmatpush1.bf16.msra.mxu0 0
      %974 = vmatprep.subr.bf16.mxu0 0
      %975 = vmatpush1.bf16.msra.mxu0 0
      %976 = vmatprep.mubr.bf16.mxu0 0
      %977 = vmatmul.mubr.bf16.gmra.mrb[0].mxu0 %v932
      %v978 = vpop.f32.mrb[0].mxu0
      %v979 = vadd.f32 0.0, %v978
      %v980 = vpop.f32.mrb[0].mxu0
      %v981 = vadd.f32 0.0, %v980
      %v982 = vpop.f32.mrb[0].mxu0
      %v983 = vpop.f32.mrb[0].mxu0
      %984 = vdwg.mxu0
      %985 = vmatprep.subr.bf16.mxu0 0
      %986 = vmatpush1.bf16.msra.mxu0 %v905
      %987 = vmatprep.subr.bf16.mxu0 0
      %988 = vmatpush1.bf16.msra.mxu0 %v908
      %989 = vmatprep.subr.bf16.mxu0 0
      %990 = vmatpush1.bf16.msra.mxu0 %v911
      %991 = vmatprep.subr.bf16.mxu0 0
      %992 = vmatpush1.bf16.msra.mxu0 %v914
      %993 = vmatprep.subr.bf16.mxu0 0
      %994 = vmatpush1.bf16.msra.mxu0 %v942
      %995 = vmatprep.subr.bf16.mxu0 0
      %996 = vmatpush1.bf16.msra.mxu0 0
      %997 = vmatprep.subr.bf16.mxu0 0
      %998 = vmatpush1.bf16.msra.mxu0 0
      %999 = vmatprep.subr.bf16.mxu0 0
      %1000 = vmatpush1.bf16.msra.mxu0 0
      %1001 = vmatprep.subr.bf16.mxu0 0
      %1002 = vmatpush1.bf16.msra.mxu0 0
      %1003 = vmatprep.subr.bf16.mxu0 0
      %1004 = vmatpush1.bf16.msra.mxu0 0
      %1005 = vmatprep.subr.bf16.mxu0 0
      %1006 = vmatpush1.bf16.msra.mxu0 0
      %1007 = vmatprep.subr.bf16.mxu0 0
      %1008 = vmatpush1.bf16.msra.mxu0 0
      %1009 = vmatprep.subr.bf16.mxu0 0
      %1010 = vmatpush1.bf16.msra.mxu0 0
      %1011 = vmatprep.subr.bf16.mxu0 0
      %1012 = vmatpush1.bf16.msra.mxu0 0
      %1013 = vmatprep.subr.bf16.mxu0 0
      %1014 = vmatpush1.bf16.msra.mxu0 0
      %1015 = vmatprep.subr.bf16.mxu0 0
      %1016 = vmatpush1.bf16.msra.mxu0 0
      %1017 = vmatprep.mubr.bf16.mxu0 0
      %1018 = vmatmul.mubr.bf16.gmra.mrb[0].mxu0 %v932
      %v1019 = vpop.f32.mrb[0].mxu0
      %v1020 = vadd.f32 0.0, %v1019
      %v1021 = vpop.f32.mrb[0].mxu0
      %v1022 = vpop.f32.mrb[0].mxu0
      %v1023 = vpop.f32.mrb[0].mxu0
      %1024 = vdwg.mxu0
      %v1025 = vld [vmem:[%s4] sm:$0xf]
      %1027 = vset.pattern.permute.xlu0 0
      %1028 = vperm.xlu0 %1027, %v1025
      %v1029 = vpop.permute.xlu0 %1028
      %v1031 = vmul.f32 %v979, %v1029
      %v1032 = vmul.f32 %v981, %v1029
      %v1033 = vmul.f32 %v1020, %v1029
      %v1034 = vld [vmem:[%s5] sm:$0xf]
      %1036 = vset.pattern.permute.xlu0 0
      %1037 = vperm.xlu0 %1036, %v1034
      %v1038 = vpop.permute.xlu0 %1037
      %v1040 = vadd.f32 %v1031, %v1038
      %v1041 = vadd.f32 %v1032, %v1038
      %v1042 = vadd.f32 %v1033, %v1038
      %v1043 = vmax.f32 %v1040, 0.0
      %v1044 = vmax.f32 %v1041, 0.0
      %v1045 = vmax.f32 %v1042, 0.0
      %1046 = vrot.lane.b32.xlu0 %v686, 124
      %v1047 = vpop.permute.xlu0 %1046
      %1048 = vrot.lane.b32.xlu0 %v687, 124
      %v1049 = vpop.permute.xlu0 %1048
      %1050 = vrot.lane.b32.xlu0 %v688, 124
      %v1051 = vpop.permute.xlu0 %1050
      %1052 = vrot.lane.b32.xlu0 %v689, 124
      %v1053 = vpop.permute.xlu0 %1052
      %vm1054 = vcmask 1014784
      %v1055 = vsel %vm1054, %v1047, %v1049
      %v1056 = vsel %vm1054, %v1049, %v1051
      %v1057 = vsel %vm1054, %v1051, %v1053
      %1062 = vrot.lane.b32.xlu0 %v686, 80
      %v1063 = vpop.permute.xlu0 %1062
      %v1064 = vsel %vm781, %v1063, %v774
      %1068 = vrot.lane.b32.xlu0 %v687, 76
      %v1069 = vpop.permute.xlu0 %1068
      %1070 = vrot.lane.b32.xlu0 %v688, 76
      %v1071 = vpop.permute.xlu0 %1070
      %1072 = vrot.lane.b32.xlu0 %v689, 76
      %v1073 = vpop.permute.xlu0 %1072
      %1074 = vrot.lane.b32.xlu0 %v690, 76
      %v1075 = vpop.permute.xlu0 %1074
      %vm1076 = vcmask 621568
      %v1077 = vsel %vm1076, %v1069, %v1071
      %v1078 = vsel %vm1076, %v1071, %v1073
      %v1079 = vsel %vm1076, %v1073, %v1075
      %1084 = vrot.lane.b32.xlu0 %v687, 32
      %v1085 = vpop.permute.xlu0 %1084
      %1086 = vrot.lane.b32.xlu0 %v688, 32
      %v1087 = vpop.permute.xlu0 %1086
      %1088 = vrot.lane.b32.xlu0 %v689, 32
      %v1089 = vpop.permute.xlu0 %1088
      %1090 = vrot.lane.b32.xlu0 %v690, 32
      %v1091 = vpop.permute.xlu0 %1090
      %vm1092 = vcmask 261120
      %v1093 = vsel %vm1092, %v1085, %v1087
      %v1094 = vsel %vm1092, %v1087, %v1089
      %v1095 = vsel %vm1092, %v1089, %v1091
      %1100 = vrot.lane.b32.xlu0 %v687, 30
      %v1101 = vpop.permute.xlu0 %1100
      %1102 = vrot.lane.b32.xlu0 %v688, 30
      %v1103 = vpop.permute.xlu0 %1102
      %1104 = vrot.lane.b32.xlu0 %v689, 30
      %v1105 = vpop.permute.xlu0 %1104
      %1106 = vrot.lane.b32.xlu0 %v690, 30
      %v1107 = vpop.permute.xlu0 %1106
      %vm1108 = vcmask 244736
      %v1109 = vsel %vm1108, %v1101, %v1103
      %v1110 = vsel %vm1108, %v1103, %v1105
      %v1111 = vsel %vm1108, %v1105, %v1107
      %1116 = vrot.lane.b32.xlu0 %v687, 28
      %v1117 = vpop.permute.xlu0 %1116
      %1118 = vrot.lane.b32.xlu0 %v688, 28
      %v1119 = vpop.permute.xlu0 %1118
      %1120 = vrot.lane.b32.xlu0 %v689, 28
      %v1121 = vpop.permute.xlu0 %1120
      %1122 = vrot.lane.b32.xlu0 %v690, 28
      %v1123 = vpop.permute.xlu0 %1122
      %vm1124 = vcmask 228352
      %v1125 = vsel %vm1124, %v1117, %v1119
      %v1126 = vsel %vm1124, %v1119, %v1121
      %v1127 = vsel %vm1124, %v1121, %v1123
      %v1132 = vpack.c.bf16 %v720, %v686
      %v1133 = vpack.c.bf16 %v721, %v687
      %v1134 = vpack.c.bf16 %v722, %v688
      %v1135 = vpack.c.bf16 %v718, %v689
      %v1136 = vpack.c.bf16 %v1064, %v1055
      %v1137 = vpack.c.bf16 %v782, %v1056
      %v1138 = vpack.c.bf16 %v783, %v1057
      %v1139 = vpack.c.bf16 %v778, %v1053
      %v1140 = vpack.c.bf16 %v1069, %v806
      %v1141 = vpack.c.bf16 %v1077, %v814
      %v1142 = vpack.c.bf16 %v1078, %v815
      %v1143 = vpack.c.bf16 %v1079, %v810
      %v1144 = vpack.c.bf16 %v1101, %v1085
      %v1145 = vpack.c.bf16 %v1109, %v1093
      %v1146 = vpack.c.bf16 %v1110, %v1094
      %v1147 = vpack.c.bf16 %v1111, %v1095
      %v1148 = vpack.c.bf16 %v1117, %v1117
      %v1149 = vpack.c.bf16 %v1125, %v1125
      %v1150 = vpack.c.bf16 %v1126, %v1126
      %v1151 = vpack.c.bf16 %v1127, %v1127
      %v1152 = vld [vmem:[%s3] sm:$0x3]
      %1173 = vrot.lane.b32.xlu0 %v1132, 50
      %v1174 = vpop.permute.xlu0 %1173
      %1175 = vrot.lane.b32.xlu0 %v1133, 50
      %v1176 = vpop.permute.xlu0 %1175
      %1177 = vrot.lane.b32.xlu0 %v1134, 50
      %v1178 = vpop.permute.xlu0 %1177
      %1179 = vrot.lane.b32.xlu0 %v1135, 50
      %v1180 = vpop.permute.xlu0 %1179
      %1181 = vrot.lane.b32.xlu0 %v1136, 50
      %v1182 = vpop.permute.xlu0 %1181
      %1183 = vrot.lane.b32.xlu0 %v1137, 50
      %v1184 = vpop.permute.xlu0 %1183
      %1185 = vrot.lane.b32.xlu0 %v1138, 50
      %v1186 = vpop.permute.xlu0 %1185
      %1187 = vrot.lane.b32.xlu0 %v1139, 50
      %v1188 = vpop.permute.xlu0 %1187
      %1189 = vrot.lane.b32.xlu0 %v1140, 50
      %v1190 = vpop.permute.xlu0 %1189
      %1191 = vrot.lane.b32.xlu0 %v1141, 50
      %v1192 = vpop.permute.xlu0 %1191
      %1193 = vrot.lane.b32.xlu0 %v1142, 50
      %v1194 = vpop.permute.xlu0 %1193
      %1195 = vrot.lane.b32.xlu0 %v1143, 50
      %v1196 = vpop.permute.xlu0 %1195
      %1197 = vrot.lane.b32.xlu0 %v1144, 50
      %v1198 = vpop.permute.xlu0 %1197
      %1199 = vrot.lane.b32.xlu0 %v1145, 50
      %v1200 = vpop.permute.xlu0 %1199
      %1201 = vrot.lane.b32.xlu0 %v1146, 50
      %v1202 = vpop.permute.xlu0 %1201
      %1203 = vrot.lane.b32.xlu0 %v1147, 50
      %v1204 = vpop.permute.xlu0 %1203
      %1205 = vrot.lane.b32.xlu0 %v1148, 50
      %v1206 = vpop.permute.xlu0 %1205
      %1207 = vrot.lane.b32.xlu0 %v1149, 50
      %v1208 = vpop.permute.xlu0 %1207
      %1209 = vrot.lane.b32.xlu0 %v1150, 50
      %v1210 = vpop.permute.xlu0 %1209
      %1211 = vrot.lane.b32.xlu0 %v1151, 50
      %v1212 = vpop.permute.xlu0 %1211
      %vm1213 = vcmask 408576
      %v1214 = vsel %vm1213, %v1174, %v1176
      %v1215 = vsel %vm1213, %v1176, %v1178
      %v1216 = vsel %vm1213, %v1178, %v1180
      %v1217 = vsel %vm1213, %v1182, %v1184
      %v1218 = vsel %vm1213, %v1184, %v1186
      %v1219 = vsel %vm1213, %v1186, %v1188
      %v1220 = vsel %vm1213, %v1190, %v1192
      %v1221 = vsel %vm1213, %v1192, %v1194
      %v1222 = vsel %vm1213, %v1194, %v1196
      %v1223 = vsel %vm1213, %v1198, %v1200
      %v1224 = vsel %vm1213, %v1200, %v1202
      %v1225 = vsel %vm1213, %v1202, %v1204
      %v1226 = vsel %vm1213, %v1206, %v1208
      %v1227 = vsel %vm1213, %v1208, %v1210
      %v1228 = vsel %vm1213, %v1210, %v1212
      %v1242 = vsel %vm930, %v1152, 0
      %v1245 = vsel %vm934, %v1226, 0
      %v1248 = vsel %vm934, %v1227, 0
      %v1251 = vsel %vm934, %v1228, 0
      %1253 = vmatprep.subr.bf16.mxu0 %v1215
      %1254 = vmatpush1.bf16.msra.mxu0 %v1214
      %1255 = vmatprep.subr.bf16.mxu0 %v1218
      %1256 = vmatpush1.bf16.msra.mxu0 %v1217
      %1257 = vmatprep.subr.bf16.mxu0 %v1221
      %1258 = vmatpush1.bf16.msra.mxu0 %v1220
      %1259 = vmatprep.subr.bf16.mxu0 %v1224
      %1260 = vmatpush1.bf16.msra.mxu0 %v1223
      %1261 = vmatprep.subr.bf16.mxu0 %v1248
      %1262 = vmatpush1.bf16.msra.mxu0 %v1245
      %1263 = vmatprep.subr.bf16.mxu0 0
      %1264 = vmatpush1.bf16.msra.mxu0 0
      %1265 = vmatprep.subr.bf16.mxu0 0
      %1266 = vmatpush1.bf16.msra.mxu0 0
      %1267 = vmatprep.subr.bf16.mxu0 0
      %1268 = vmatpush1.bf16.msra.mxu0 0
      %1269 = vmatprep.subr.bf16.mxu0 0
      %1270 = vmatpush1.bf16.msra.mxu0 0
      %1271 = vmatprep.subr.bf16.mxu0 0
      %1272 = vmatpush1.bf16.msra.mxu0 0
      %1273 = vmatprep.subr.bf16.mxu0 0
      %1274 = vmatpush1.bf16.msra.mxu0 0
      %1275 = vmatprep.subr.bf16.mxu0 0
      %1276 = vmatpush1.bf16.msra.mxu0 0
      %1277 = vmatprep.subr.bf16.mxu0 0
      %1278 = vmatpush1.bf16.msra.mxu0 0
      %1279 = vmatprep.subr.bf16.mxu0 0
      %1280 = vmatpush1.bf16.msra.mxu0 0
      %1281 = vmatprep.subr.bf16.mxu0 0
      %1282 = vmatpush1.bf16.msra.mxu0 0
      %1283 = vmatprep.subr.bf16.mxu0 0
      %1284 = vmatpush1.bf16.msra.mxu0 0
      %1285 = vmatprep.mubr.bf16.mxu0 0
      %1286 = vmatmul.mubr.bf16.gmra.mrb[0].mxu0 %v1242
      %v1287 = vpop.f32.mrb[0].mxu0
      %v1288 = vadd.f32 0.0, %v1287
      %v1289 = vpop.f32.mrb[0].mxu0
      %v1290 = vadd.f32 0.0, %v1289
      %v1291 = vpop.f32.mrb[0].mxu0
      %v1292 = vpop.f32.mrb[0].mxu0
      %1293 = vdwg.mxu0
      %1294 = vmatprep.subr.bf16.mxu0 0
      %1295 = vmatpush1.bf16.msra.mxu0 %v1216
      %1296 = vmatprep.subr.bf16.mxu0 0
      %1297 = vmatpush1.bf16.msra.mxu0 %v1219
      %1298 = vmatprep.subr.bf16.mxu0 0
      %1299 = vmatpush1.bf16.msra.mxu0 %v1222
      %1300 = vmatprep.subr.bf16.mxu0 0
      %1301 = vmatpush1.bf16.msra.mxu0 %v1225
      %1302 = vmatprep.subr.bf16.mxu0 0
      %1303 = vmatpush1.bf16.msra.mxu0 %v1251
      %1304 = vmatprep.subr.bf16.mxu0 0
      %1305 = vmatpush1.bf16.msra.mxu0 0
      %1306 = vmatprep.subr.bf16.mxu0 0
      %1307 = vmatpush1.bf16.msra.mxu0 0
      %1308 = vmatprep.subr.bf16.mxu0 0
      %1309 = vmatpush1.bf16.msra.mxu0 0
      %1310 = vmatprep.subr.bf16.mxu0 0
      %1311 = vmatpush1.bf16.msra.mxu0 0
      %1312 = vmatprep.subr.bf16.mxu0 0
      %1313 = vmatpush1.bf16.msra.mxu0 0
      %1314 = vmatprep.subr.bf16.mxu0 0
      %1315 = vmatpush1.bf16.msra.mxu0 0
      %1316 = vmatprep.subr.bf16.mxu0 0
      %1317 = vmatpush1.bf16.msra.mxu0 0
      %1318 = vmatprep.subr.bf16.mxu0 0
      %1319 = vmatpush1.bf16.msra.mxu0 0
      %1320 = vmatprep.subr.bf16.mxu0 0
      %1321 = vmatpush1.bf16.msra.mxu0 0
      %1322 = vmatprep.subr.bf16.mxu0 0
      %1323 = vmatpush1.bf16.msra.mxu0 0
      %1324 = vmatprep.subr.bf16.mxu0 0
      %1325 = vmatpush1.bf16.msra.mxu0 0
      %1326 = vmatprep.mubr.bf16.mxu0 0
      %1327 = vmatmul.mubr.bf16.gmra.mrb[0].mxu0 %v1242
      %v1328 = vpop.f32.mrb[0].mxu0
      %v1329 = vadd.f32 0.0, %v1328
      %v1330 = vpop.f32.mrb[0].mxu0
      %v1331 = vpop.f32.mrb[0].mxu0
      %v1332 = vpop.f32.mrb[0].mxu0
      %1333 = vdwg.mxu0
      %v1334 = vld [vmem:[%s6] sm:$0xf]
      %1336 = vset.pattern.permute.xlu0 0
      %1337 = vperm.xlu0 %1336, %v1334
      %v1338 = vpop.permute.xlu0 %1337
      %v1340 = vmul.f32 %v1288, %v1338
      %v1341 = vmul.f32 %v1290, %v1338
      %v1342 = vmul.f32 %v1329, %v1338
      %v1343 = vld [vmem:[%s7] sm:$0xf]
      %1345 = vset.pattern.permute.xlu0 0
      %1346 = vperm.xlu0 %1345, %v1343
      %v1347 = vpop.permute.xlu0 %1346
      %v1349 = vadd.f32 %v1340, %v1347
      %v1350 = vadd.f32 %v1341, %v1347
      %v1351 = vadd.f32 %v1342, %v1347
      %v1352 = vmax.f32 %v1349, 0.0
      %v1353 = vmax.f32 %v1350, 0.0
      %v1354 = vmax.f32 %v1351, 0.0
      %v1355 = vadd.f32 %v1043, %v1352
      %v1356 = vadd.f32 %v1044, %v1353
      %v1357 = vadd.f32 %v1045, %v1354
      %v1359 = vlaneseq
      %v1360 = vshrl.u32 %v1359, 7
      %v1361 = vsub.s32 0, %v1360
      %v1362 = vrot.slane %v685, %v1361
      %v1363 = vlaneseq
      %v1364 = vshrl.u32 %v1363, 7
      %v1365 = vsub.s32 1, %v1364
      %v1366 = vrot.slane %v685, %v1365
      %v1367 = vlaneseq
      %v1368 = vshrl.u32 %v1367, 7
      %v1369 = vsub.s32 2, %v1368
      %v1370 = vrot.slane %v685, %v1369
      %v1374 = vmul.f32 %v1355, %v1362
      %v1375 = vmul.f32 %v1356, %v1366
      %v1376 = vmul.f32 %v1357, %v1370
      %v1377 = vsel %vm934, %v1374, 0.0
      %v1378 = vsel %vm934, %v1375, 0.0
      %v1379 = vadd.f32 %v1377, %v1378
      %v1380 = vsel %vm934, %v1376, 0.0
      %v1381 = vadd.f32 %v1379, %v1380
      %1382 = vadd.xlane.f32.xlu0 %v1381
      %v1383 = vpop.xlane.xlu0 %1382
      %v1384 = vmul.f32 %v1383, 0.00390625
      %v1385 = vld [vmem:[%s8] sm:$0xff]
      %v1386 = vld [vmem:[%s8 + $0x8] sm:$0xff]
      %v1387 = vld [vmem:[%s8 + $0x10] sm:$0xff]
      %v1388 = vld [vmem:[%s8 + $0x18] sm:$0xff]
      %v1389 = vld [vmem:[%s9] sm:$0xff]
      %v1390 = vld [vmem:[%s9 + $0x8] sm:$0xff]
      %v1391 = vld [vmem:[%s9 + $0x10] sm:$0xff]
      %v1392 = vld [vmem:[%s9 + $0x18] sm:$0xff]
      %vm1393 = vcmask 31744
      %v1395 = vsel %vm1393, %v1385, 0
      %v1398 = vsel %vm1393, %v1386, 0
      %v1401 = vsel %vm1393, %v1387, 0
      %v1404 = vsel %vm1393, %v1388, 0
      %v1407 = vsel %vm934, %v1384, 0
      %1409 = vmatprep.subr.mxu0 0.0
      %1410 = vmatpush1.msra.mxu0 %v1407
      %1411 = vmatprep.subr.mxu0 0.0
      %1412 = vmatpush1.msra.mxu0 0.0
      %1413 = vmatprep.subr.mxu0 0.0
      %1414 = vmatpush1.msra.mxu0 0.0
      %1415 = vmatprep.subr.mxu0 0.0
      %1416 = vmatpush1.msra.mxu0 0.0
      %1417 = vmatprep.subr.mxu0 0.0
      %1418 = vmatpush1.msra.mxu0 0.0
      %1419 = vmatprep.subr.mxu0 0.0
      %1420 = vmatpush1.msra.mxu0 0.0
      %1421 = vmatprep.subr.mxu0 0.0
      %1422 = vmatpush1.msra.mxu0 0.0
      %1423 = vmatprep.subr.mxu0 0.0
      %1424 = vmatpush1.msra.mxu0 0.0
      %1425 = vmatprep.subr.mxu0 0.0
      %1426 = vmatpush1.msra.mxu0 0.0
      %1427 = vmatprep.subr.mxu0 0.0
      %1428 = vmatpush1.msra.mxu0 0.0
      %1429 = vmatprep.subr.mxu0 0.0
      %1430 = vmatpush1.msra.mxu0 0.0
      %1431 = vmatprep.subr.mxu0 0.0
      %1432 = vmatpush1.msra.mxu0 0.0
      %1433 = vmatprep.subr.mxu0 0.0
      %1434 = vmatpush1.msra.mxu0 0.0
      %1435 = vmatprep.subr.mxu0 0.0
      %1436 = vmatpush1.msra.mxu0 0.0
      %1437 = vmatprep.subr.mxu0 0.0
      %1438 = vmatpush1.msra.mxu0 0.0
      %1439 = vmatprep.subr.mxu0 0.0
      %1440 = vmatpush1.msra.mxu0 0.0
      %1441 = vmatprep.subr.mxu0 0.0
      %1442 = vmatpush1.msra.mxu0 0.0
      %1443 = vmatprep.subr.mxu0 0.0
      %1444 = vmatpush1.msra.mxu0 0.0
      %1445 = vmatprep.subr.mxu0 0.0
      %1446 = vmatpush1.msra.mxu0 0.0
      %1447 = vmatprep.subr.mxu0 0.0
      %1448 = vmatpush1.msra.mxu0 0.0
      %1449 = vmatprep.subr.mxu0 0.0
      %1450 = vmatpush1.msra.mxu0 0.0
      %1451 = vmatprep.subr.mxu0 0.0
      %1452 = vmatpush1.msra.mxu0 0.0
      %1453 = vmatprep.subr.mxu0 0.0
      %1454 = vmatpush1.msra.mxu0 0.0
      %1455 = vmatprep.subr.mxu0 0.0
      %1456 = vmatpush1.msra.mxu0 0.0
      %1457 = vmatprep.subr.mxu0 0.0
      %1458 = vmatpush1.msra.mxu0 0.0
      %1459 = vmatprep.subr.mxu0 0.0
      %1460 = vmatpush1.msra.mxu0 0.0
      %1461 = vmatprep.subr.mxu0 0.0
      %1462 = vmatpush1.msra.mxu0 0.0
      %1463 = vmatprep.subr.mxu0 0.0
      %1464 = vmatpush1.msra.mxu0 0.0
      %1465 = vmatprep.subr.mxu0 0.0
      %1466 = vmatpush1.msra.mxu0 0.0
      %1467 = vmatprep.subr.mxu0 0.0
      %1468 = vmatpush1.msra.mxu0 0.0
      %1469 = vmatprep.subr.mxu0 0.0
      %1470 = vmatpush1.msra.mxu0 0.0
      %1471 = vmatprep.subr.mxu0 0.0
      %1472 = vmatpush1.msra.mxu0 0.0
      %1473 = vmatprep.mubr.f32.mxu0 0.0
      %1474 = vmatmul.mubr.f32.gmra.mrb[0].mxu0 %v1395
      %v1475 = vpop.f32.mrb[0].mxu0
      %v1476 = vadd.f32 %v1389, %v1475
      %v1477 = vpop.f32.mrb[0].mxu0
      %1478 = vmatprep.mubr.f32.mxu0 0.0
      %1479 = vmatmul.mubr.f32.gmra.mrb[0].mxu0 %v1398
      %v1480 = vpop.f32.mrb[0].mxu0
      %v1481 = vadd.f32 %v1390, %v1480
      %v1482 = vpop.f32.mrb[0].mxu0
      %1483 = vmatprep.mubr.f32.mxu0 0.0
      %1484 = vmatmul.mubr.f32.gmra.mrb[0].mxu0 %v1401
      %v1485 = vpop.f32.mrb[0].mxu0
      %v1486 = vadd.f32 %v1391, %v1485
      %v1487 = vpop.f32.mrb[0].mxu0
      %1488 = vmatprep.mubr.f32.mxu0 0.0
      %1489 = vmatmul.mubr.f32.gmra.mrb[0].mxu0 %v1404
      %v1490 = vpop.f32.mrb[0].mxu0
      %v1491 = vadd.f32 %v1392, %v1490
      %v1492 = vpop.f32.mrb[0].mxu0
      %1493 = vdwg.mxu0
      %v1494 = vmax.f32 %v1476, 0.0
      %v1495 = vmax.f32 %v1481, 0.0
      %v1496 = vmax.f32 %v1486, 0.0
      %v1497 = vmax.f32 %v1491, 0.0
      %v1498 = vld [vmem:[%s10] sm:$0xf]
      %v1500 = vsel %vm1092, %v1498, 0
      %1502 = vmatprep.subr.mxu0 0.0
      %1503 = vmatpush1.msra.mxu0 %v1494
      %1504 = vmatprep.subr.mxu0 0.0
      %1505 = vmatpush1.msra.mxu0 %v1495
      %1506 = vmatprep.subr.mxu0 0.0
      %1507 = vmatpush1.msra.mxu0 %v1496
      %1508 = vmatprep.subr.mxu0 0.0
      %1509 = vmatpush1.msra.mxu0 %v1497
      %1510 = vmatprep.subr.mxu0 0.0
      %1511 = vmatpush1.msra.mxu0 0.0
      %1512 = vmatprep.subr.mxu0 0.0
      %1513 = vmatpush1.msra.mxu0 0.0
      %1514 = vmatprep.subr.mxu0 0.0
      %1515 = vmatpush1.msra.mxu0 0.0
      %1516 = vmatprep.subr.mxu0 0.0
      %1517 = vmatpush1.msra.mxu0 0.0
      %1518 = vmatprep.subr.mxu0 0.0
      %1519 = vmatpush1.msra.mxu0 0.0
      %1520 = vmatprep.subr.mxu0 0.0
      %1521 = vmatpush1.msra.mxu0 0.0
      %1522 = vmatprep.subr.mxu0 0.0
      %1523 = vmatpush1.msra.mxu0 0.0
      %1524 = vmatprep.subr.mxu0 0.0
      %1525 = vmatpush1.msra.mxu0 0.0
      %1526 = vmatprep.subr.mxu0 0.0
      %1527 = vmatpush1.msra.mxu0 0.0
      %1528 = vmatprep.subr.mxu0 0.0
      %1529 = vmatpush1.msra.mxu0 0.0
      %1530 = vmatprep.subr.mxu0 0.0
      %1531 = vmatpush1.msra.mxu0 0.0
      %1532 = vmatprep.subr.mxu0 0.0
      %1533 = vmatpush1.msra.mxu0 0.0
      %1534 = vmatprep.subr.mxu0 0.0
      %1535 = vmatpush1.msra.mxu0 0.0
      %1536 = vmatprep.subr.mxu0 0.0
      %1537 = vmatpush1.msra.mxu0 0.0
      %1538 = vmatprep.subr.mxu0 0.0
      %1539 = vmatpush1.msra.mxu0 0.0
      %1540 = vmatprep.subr.mxu0 0.0
      %1541 = vmatpush1.msra.mxu0 0.0
      %1542 = vmatprep.subr.mxu0 0.0
      %1543 = vmatpush1.msra.mxu0 0.0
      %1544 = vmatprep.subr.mxu0 0.0
      %1545 = vmatpush1.msra.mxu0 0.0
      %1546 = vmatprep.subr.mxu0 0.0
      %1547 = vmatpush1.msra.mxu0 0.0
      %1548 = vmatprep.subr.mxu0 0.0
      %1549 = vmatpush1.msra.mxu0 0.0
      %1550 = vmatprep.subr.mxu0 0.0
      %1551 = vmatpush1.msra.mxu0 0.0
      %1552 = vmatprep.subr.mxu0 0.0
      %1553 = vmatpush1.msra.mxu0 0.0
      %1554 = vmatprep.subr.mxu0 0.0
      %1555 = vmatpush1.msra.mxu0 0.0
      %1556 = vmatprep.subr.mxu0 0.0
      %1557 = vmatpush1.msra.mxu0 0.0
      %1558 = vmatprep.subr.mxu0 0.0
      %1559 = vmatpush1.msra.mxu0 0.0
      %1560 = vmatprep.subr.mxu0 0.0
      %1561 = vmatpush1.msra.mxu0 0.0
      %1562 = vmatprep.subr.mxu0 0.0
      %1563 = vmatpush1.msra.mxu0 0.0
      %1564 = vmatprep.subr.mxu0 0.0
      %1565 = vmatpush1.msra.mxu0 0.0
      %1566 = vmatprep.mubr.f32.mxu0 0.0
      %1567 = vmatmul.mubr.f32.gmra.mrb[0].mxu0 %v1500
      %v1568 = vpop.f32.mrb[0].mxu0
      %v1569 = vadd.f32 0.0, %v1568
      %v1570 = vpop.f32.mrb[0].mxu0
      %1571 = vdwg.mxu0
      %v1572 = vld [vmem:[%s11] sm:$0xf]
      %v1574 = vsel %vm1092, %v1572, 0
      %1576 = vmatprep.subr.mxu0 0.0
      %1577 = vmatpush1.msra.mxu0 %v1494
      %1578 = vmatprep.subr.mxu0 0.0
      %1579 = vmatpush1.msra.mxu0 %v1495
      %1580 = vmatprep.subr.mxu0 0.0
      %1581 = vmatpush1.msra.mxu0 %v1496
      %1582 = vmatprep.subr.mxu0 0.0
      %1583 = vmatpush1.msra.mxu0 %v1497
      %1584 = vmatprep.subr.mxu0 0.0
      %1585 = vmatpush1.msra.mxu0 0.0
      %1586 = vmatprep.subr.mxu0 0.0
      %1587 = vmatpush1.msra.mxu0 0.0
      %1588 = vmatprep.subr.mxu0 0.0
      %1589 = vmatpush1.msra.mxu0 0.0
      %1590 = vmatprep.subr.mxu0 0.0
      %1591 = vmatpush1.msra.mxu0 0.0
      %1592 = vmatprep.subr.mxu0 0.0
      %1593 = vmatpush1.msra.mxu0 0.0
      %1594 = vmatprep.subr.mxu0 0.0
      %1595 = vmatpush1.msra.mxu0 0.0
      %1596 = vmatprep.subr.mxu0 0.0
      %1597 = vmatpush1.msra.mxu0 0.0
      %1598 = vmatprep.subr.mxu0 0.0
      %1599 = vmatpush1.msra.mxu0 0.0
      %1600 = vmatprep.subr.mxu0 0.0
      %1601 = vmatpush1.msra.mxu0 0.0
      %1602 = vmatprep.subr.mxu0 0.0
      %1603 = vmatpush1.msra.mxu0 0.0
      %1604 = vmatprep.subr.mxu0 0.0
      %1605 = vmatpush1.msra.mxu0 0.0
      %1606 = vmatprep.subr.mxu0 0.0
      %1607 = vmatpush1.msra.mxu0 0.0
      %1608 = vmatprep.subr.mxu0 0.0
      %1609 = vmatpush1.msra.mxu0 0.0
      %1610 = vmatprep.subr.mxu0 0.0
      %1611 = vmatpush1.msra.mxu0 0.0
      %1612 = vmatprep.subr.mxu0 0.0
      %1613 = vmatpush1.msra.mxu0 0.0
      %1614 = vmatprep.subr.mxu0 0.0
      %1615 = vmatpush1.msra.mxu0 0.0
      %1616 = vmatprep.subr.mxu0 0.0
      %1617 = vmatpush1.msra.mxu0 0.0
      %1618 = vmatprep.subr.mxu0 0.0
      %1619 = vmatpush1.msra.mxu0 0.0
      %1620 = vmatprep.subr.mxu0 0.0
      %1621 = vmatpush1.msra.mxu0 0.0
      %1622 = vmatprep.subr.mxu0 0.0
      %1623 = vmatpush1.msra.mxu0 0.0
      %1624 = vmatprep.subr.mxu0 0.0
      %1625 = vmatpush1.msra.mxu0 0.0
      %1626 = vmatprep.subr.mxu0 0.0
      %1627 = vmatpush1.msra.mxu0 0.0
      %1628 = vmatprep.subr.mxu0 0.0
      %1629 = vmatpush1.msra.mxu0 0.0
      %1630 = vmatprep.subr.mxu0 0.0
      %1631 = vmatpush1.msra.mxu0 0.0
      %1632 = vmatprep.subr.mxu0 0.0
      %1633 = vmatpush1.msra.mxu0 0.0
      %1634 = vmatprep.subr.mxu0 0.0
      %1635 = vmatpush1.msra.mxu0 0.0
      %1636 = vmatprep.subr.mxu0 0.0
      %1637 = vmatpush1.msra.mxu0 0.0
      %1638 = vmatprep.subr.mxu0 0.0
      %1639 = vmatpush1.msra.mxu0 0.0
      %1640 = vmatprep.mubr.f32.mxu0 0.0
      %1641 = vmatmul.mubr.f32.gmra.mrb[0].mxu0 %v1574
      %v1642 = vpop.f32.mrb[0].mxu0
      %v1643 = vadd.f32 0.0, %v1642
      %v1644 = vpop.f32.mrb[0].mxu0
      %1645 = vdwg.mxu0
      %v1646 = vsub.f32 %v1643, %v1569
      %v1647 = vmul.f32 %v1646, 1.442695
      %v1648 = vpow.pop %v1647
      %v1649 = vadd.f32 %v1648, 1.0
      %v1650 = vrcp.pop %v1649
      %1652 = vset.pattern.permute.xlu0 0
      %1653 = vperm.xlu0 %1652, %v1650
      %v1654 = vpop.permute.xlu0 %1653
      %v1656 = vmul.f32 %v1043, %v1654
      %v1657 = vmul.f32 %v1044, %v1654
      %v1658 = vmul.f32 %v1045, %v1654
      %v1659 = vsub.f32 1.0, %v1650
      %1661 = vset.pattern.permute.xlu0 0
      %1662 = vperm.xlu0 %1661, %v1659
      %v1663 = vpop.permute.xlu0 %1662
      %v1665 = vmul.f32 %v1352, %v1663
      %v1666 = vmul.f32 %v1353, %v1663
      %v1667 = vmul.f32 %v1354, %v1663
      %v1668 = vadd.f32 %v1656, %v1665
      %v1669 = vadd.f32 %v1657, %v1666
      %v1670 = vadd.f32 %v1658, %v1667
      %1671 = vst [vmem:[#allocation2] sm:$0xff] 0.0
      %1672 = vst [vmem:[#allocation2 + $0x8] sm:$0xff] 0.0
      %1673 = vst [vmem:[#allocation2 + $0x10] sm:$0xff] 0.0
      %1674 = vst [vmem:[#allocation2 + $0x18] sm:$0xff] 0.0
      %1675 = vst [vmem:[#allocation2 + $0x20] sm:$0xff] 0.0
      %v1676 = vmul.f32 %v1668, %v1362
      %v1677 = vmul.f32 %v1669, %v1366
      %v1678 = vmul.f32 %v1670, %v1370
      %1679 = vst [vmem:[#allocation2 + $0x8] sm:$0xf] %v1676
      %1680 = vst [vmem:[#allocation2 + $0x10] sm:$0xf] %v1677
      %1681 = vst [vmem:[#allocation2 + $0x18] sm:$0xf] %v1678
      %v1682 = vld [vmem:[#allocation2] sm:$0xff]
      %v1683 = vld [vmem:[#allocation2 + $0x8] sm:$0xff]
      %v1684 = vld [vmem:[#allocation2 + $0x10] sm:$0xff]
      %v1685 = vld [vmem:[#allocation2 + $0x18] sm:$0xff]
      %v1686 = vld [vmem:[#allocation2 + $0x20] sm:$0xff]
      %1691 = vrot.lane.b32.xlu0 %v1682, 127
      %v1692 = vpop.permute.xlu0 %1691
      %1693 = vrot.lane.b32.xlu0 %v1683, 127
      %v1694 = vpop.permute.xlu0 %1693
      %1695 = vrot.lane.b32.xlu0 %v1684, 127
      %v1696 = vpop.permute.xlu0 %1695
      %1697 = vrot.lane.b32.xlu0 %v1685, 127
      %v1698 = vpop.permute.xlu0 %1697
      %v1699 = vsel %vm703, %v1692, %v1694
      %v1700 = vsel %vm703, %v1694, %v1696
      %v1701 = vsel %vm703, %v1696, %v1698
      %1706 = vrot.lane.b32.xlu0 %v1682, 126
      %v1707 = vpop.permute.xlu0 %1706
      %1708 = vrot.lane.b32.xlu0 %v1683, 126
      %v1709 = vpop.permute.xlu0 %1708
      %1710 = vrot.lane.b32.xlu0 %v1684, 126
      %v1711 = vpop.permute.xlu0 %1710
      %1712 = vrot.lane.b32.xlu0 %v1685, 126
      %v1713 = vpop.permute.xlu0 %1712
      %v1714 = vsel %vm719, %v1707, %v1709
      %v1715 = vsel %vm719, %v1709, %v1711
      %v1716 = vsel %vm719, %v1711, %v1713
      %1721 = vrot.lane.b32.xlu0 %v1682, 104
      %v1722 = vpop.permute.xlu0 %1721
      %1723 = vrot.lane.b32.xlu0 %v1683, 104
      %v1724 = vpop.permute.xlu0 %1723
      %1725 = vrot.lane.b32.xlu0 %v1684, 104
      %v1726 = vpop.permute.xlu0 %1725
      %1727 = vrot.lane.b32.xlu0 %v1685, 104
      %v1728 = vpop.permute.xlu0 %1727
      %v1729 = vsel %vm735, %v1722, %v1724
      %v1730 = vsel %vm735, %v1724, %v1726
      %v1731 = vsel %vm735, %v1726, %v1728
      %1736 = vrot.lane.b32.xlu0 %v1683, 103
      %v1737 = vpop.permute.xlu0 %1736
      %1738 = vrot.lane.b32.xlu0 %v1684, 103
      %v1739 = vpop.permute.xlu0 %1738
      %1740 = vrot.lane.b32.xlu0 %v1685, 103
      %v1741 = vpop.permute.xlu0 %1740
      %v1742 = vsel %vm749, %v1737, %v1739
      %v1743 = vsel %vm749, %v1739, %v1741
      %1749 = vrot.lane.b32.xlu0 %v1683, 102
      %v1750 = vpop.permute.xlu0 %1749
      %1751 = vrot.lane.b32.xlu0 %v1684, 102
      %v1752 = vpop.permute.xlu0 %1751
      %1753 = vrot.lane.b32.xlu0 %v1685, 102
      %v1754 = vpop.permute.xlu0 %1753
      %1755 = vrot.lane.b32.xlu0 %v1686, 102
      %v1756 = vpop.permute.xlu0 %1755
      %v1757 = vsel %vm765, %v1750, %v1752
      %v1758 = vsel %vm765, %v1752, %v1754
      %v1759 = vsel %vm765, %v1754, %v1756
      %1764 = vrot.lane.b32.xlu0 %v1683, 80
      %v1765 = vpop.permute.xlu0 %1764
      %1766 = vrot.lane.b32.xlu0 %v1684, 80
      %v1767 = vpop.permute.xlu0 %1766
      %1768 = vrot.lane.b32.xlu0 %v1685, 80
      %v1769 = vpop.permute.xlu0 %1768
      %1770 = vrot.lane.b32.xlu0 %v1686, 80
      %v1771 = vpop.permute.xlu0 %1770
      %v1772 = vsel %vm781, %v1765, %v1767
      %v1773 = vsel %vm781, %v1767, %v1769
      %v1774 = vsel %vm781, %v1769, %v1771
      %1779 = vrot.lane.b32.xlu0 %v1683, 79
      %v1780 = vpop.permute.xlu0 %1779
      %1781 = vrot.lane.b32.xlu0 %v1684, 79
      %v1782 = vpop.permute.xlu0 %1781
      %1783 = vrot.lane.b32.xlu0 %v1685, 79
      %v1784 = vpop.permute.xlu0 %1783
      %1785 = vrot.lane.b32.xlu0 %v1686, 79
      %v1786 = vpop.permute.xlu0 %1785
      %v1787 = vsel %vm797, %v1780, %v1782
      %v1788 = vsel %vm797, %v1782, %v1784
      %v1789 = vsel %vm797, %v1784, %v1786
      %1794 = vrot.lane.b32.xlu0 %v1683, 78
      %v1795 = vpop.permute.xlu0 %1794
      %1796 = vrot.lane.b32.xlu0 %v1684, 78
      %v1797 = vpop.permute.xlu0 %1796
      %1798 = vrot.lane.b32.xlu0 %v1685, 78
      %v1799 = vpop.permute.xlu0 %1798
      %1800 = vrot.lane.b32.xlu0 %v1686, 78
      %v1801 = vpop.permute.xlu0 %1800
      %v1802 = vsel %vm813, %v1795, %v1797
      %v1803 = vsel %vm813, %v1797, %v1799
      %v1804 = vsel %vm813, %v1799, %v1801
      %v1809 = vpack.c.bf16 %v1699, %v1682
      %v1810 = vpack.c.bf16 %v1700, %v1683
      %v1811 = vpack.c.bf16 %v1701, %v1684
      %v1812 = vpack.c.bf16 %v1698, %v1685
      %v1813 = vpack.c.bf16 %v1729, %v1714
      %v1814 = vpack.c.bf16 %v1730, %v1715
      %v1815 = vpack.c.bf16 %v1731, %v1716
      %v1816 = vpack.c.bf16 %v1728, %v1713
      %v1817 = vpack.c.bf16 %v1750, %v1737
      %v1818 = vpack.c.bf16 %v1757, %v1742
      %v1819 = vpack.c.bf16 %v1758, %v1743
      %v1820 = vpack.c.bf16 %v1759, %v1741
      %v1821 = vpack.c.bf16 %v1780, %v1765
      %v1822 = vpack.c.bf16 %v1787, %v1772
      %v1823 = vpack.c.bf16 %v1788, %v1773
      %v1824 = vpack.c.bf16 %v1789, %v1774
      %v1825 = vpack.c.bf16 %v1795, %v1795
      %v1826 = vpack.c.bf16 %v1802, %v1802
      %v1827 = vpack.c.bf16 %v1803, %v1803
      %v1828 = vpack.c.bf16 %v1804, %v1804
      %v1829 = vld [vmem:[%s12] sm:$0x3]
      %1850 = vrot.lane.b32.xlu0 %v1809, 25
      %v1851 = vpop.permute.xlu0 %1850
      %1852 = vrot.lane.b32.xlu0 %v1810, 25
      %v1853 = vpop.permute.xlu0 %1852
      %1854 = vrot.lane.b32.xlu0 %v1811, 25
      %v1855 = vpop.permute.xlu0 %1854
      %1856 = vrot.lane.b32.xlu0 %v1812, 25
      %v1857 = vpop.permute.xlu0 %1856
      %1858 = vrot.lane.b32.xlu0 %v1813, 25
      %v1859 = vpop.permute.xlu0 %1858
      %1860 = vrot.lane.b32.xlu0 %v1814, 25
      %v1861 = vpop.permute.xlu0 %1860
      %1862 = vrot.lane.b32.xlu0 %v1815, 25
      %v1863 = vpop.permute.xlu0 %1862
      %1864 = vrot.lane.b32.xlu0 %v1816, 25
      %v1865 = vpop.permute.xlu0 %1864
      %1866 = vrot.lane.b32.xlu0 %v1817, 25
      %v1867 = vpop.permute.xlu0 %1866
      %1868 = vrot.lane.b32.xlu0 %v1818, 25
      %v1869 = vpop.permute.xlu0 %1868
      %1870 = vrot.lane.b32.xlu0 %v1819, 25
      %v1871 = vpop.permute.xlu0 %1870
      %1872 = vrot.lane.b32.xlu0 %v1820, 25
      %v1873 = vpop.permute.xlu0 %1872
      %1874 = vrot.lane.b32.xlu0 %v1821, 25
      %v1875 = vpop.permute.xlu0 %1874
      %1876 = vrot.lane.b32.xlu0 %v1822, 25
      %v1877 = vpop.permute.xlu0 %1876
      %1878 = vrot.lane.b32.xlu0 %v1823, 25
      %v1879 = vpop.permute.xlu0 %1878
      %1880 = vrot.lane.b32.xlu0 %v1824, 25
      %v1881 = vpop.permute.xlu0 %1880
      %1882 = vrot.lane.b32.xlu0 %v1825, 25
      %v1883 = vpop.permute.xlu0 %1882
      %1884 = vrot.lane.b32.xlu0 %v1826, 25
      %v1885 = vpop.permute.xlu0 %1884
      %1886 = vrot.lane.b32.xlu0 %v1827, 25
      %v1887 = vpop.permute.xlu0 %1886
      %1888 = vrot.lane.b32.xlu0 %v1828, 25
      %v1889 = vpop.permute.xlu0 %1888
      %v1890 = vsel %vm902, %v1851, %v1853
      %v1891 = vsel %vm902, %v1853, %v1855
      %v1892 = vsel %vm902, %v1855, %v1857
      %v1893 = vsel %vm902, %v1859, %v1861
      %v1894 = vsel %vm902, %v1861, %v1863
      %v1895 = vsel %vm902, %v1863, %v1865
      %v1896 = vsel %vm902, %v1867, %v1869
      %v1897 = vsel %vm902, %v1869, %v1871
      %v1898 = vsel %vm902, %v1871, %v1873
      %v1899 = vsel %vm902, %v1875, %v1877
      %v1900 = vsel %vm902, %v1877, %v1879
      %v1901 = vsel %vm902, %v1879, %v1881
      %v1902 = vsel %vm902, %v1883, %v1885
      %v1903 = vsel %vm902, %v1885, %v1887
      %v1904 = vsel %vm902, %v1887, %v1889
      %v1918 = vsel %vm930, %v1829, 0
      %v1921 = vsel %vm934, %v1902, 0
      %v1924 = vsel %vm934, %v1903, 0
      %v1927 = vsel %vm934, %v1904, 0
      %1929 = vmatprep.subr.bf16.mxu0 %v1891
      %1930 = vmatpush1.bf16.msra.mxu0 %v1890
      %1931 = vmatprep.subr.bf16.mxu0 %v1894
      %1932 = vmatpush1.bf16.msra.mxu0 %v1893
      %1933 = vmatprep.subr.bf16.mxu0 %v1897
      %1934 = vmatpush1.bf16.msra.mxu0 %v1896
      %1935 = vmatprep.subr.bf16.mxu0 %v1900
      %1936 = vmatpush1.bf16.msra.mxu0 %v1899
      %1937 = vmatprep.subr.bf16.mxu0 %v1924
      %1938 = vmatpush1.bf16.msra.mxu0 %v1921
      %1939 = vmatprep.subr.bf16.mxu0 0
      %1940 = vmatpush1.bf16.msra.mxu0 0
      %1941 = vmatprep.subr.bf16.mxu0 0
      %1942 = vmatpush1.bf16.msra.mxu0 0
      %1943 = vmatprep.subr.bf16.mxu0 0
      %1944 = vmatpush1.bf16.msra.mxu0 0
      %1945 = vmatprep.subr.bf16.mxu0 0
      %1946 = vmatpush1.bf16.msra.mxu0 0
      %1947 = vmatprep.subr.bf16.mxu0 0
      %1948 = vmatpush1.bf16.msra.mxu0 0
      %1949 = vmatprep.subr.bf16.mxu0 0
      %1950 = vmatpush1.bf16.msra.mxu0 0
      %1951 = vmatprep.subr.bf16.mxu0 0
      %1952 = vmatpush1.bf16.msra.mxu0 0
      %1953 = vmatprep.subr.bf16.mxu0 0
      %1954 = vmatpush1.bf16.msra.mxu0 0
      %1955 = vmatprep.subr.bf16.mxu0 0
      %1956 = vmatpush1.bf16.msra.mxu0 0
      %1957 = vmatprep.subr.bf16.mxu0 0
      %1958 = vmatpush1.bf16.msra.mxu0 0
      %1959 = vmatprep.subr.bf16.mxu0 0
      %1960 = vmatpush1.bf16.msra.mxu0 0
      %1961 = vmatprep.mubr.bf16.mxu0 0
      %1962 = vmatmul.mubr.bf16.gmra.mrb[0].mxu0 %v1918
      %v1963 = vpop.f32.mrb[0].mxu0
      %v1964 = vadd.f32 0.0, %v1963
      %v1965 = vpop.f32.mrb[0].mxu0
      %v1966 = vadd.f32 0.0, %v1965
      %v1967 = vpop.f32.mrb[0].mxu0
      %v1968 = vpop.f32.mrb[0].mxu0
      %1969 = vdwg.mxu0
      %1970 = vmatprep.subr.bf16.mxu0 0
      %1971 = vmatpush1.bf16.msra.mxu0 %v1892
      %1972 = vmatprep.subr.bf16.mxu0 0
      %1973 = vmatpush1.bf16.msra.mxu0 %v1895
      %1974 = vmatprep.subr.bf16.mxu0 0
      %1975 = vmatpush1.bf16.msra.mxu0 %v1898
      %1976 = vmatprep.subr.bf16.mxu0 0
      %1977 = vmatpush1.bf16.msra.mxu0 %v1901
      %1978 = vmatprep.subr.bf16.mxu0 0
      %1979 = vmatpush1.bf16.msra.mxu0 %v1927
      %1980 = vmatprep.subr.bf16.mxu0 0
      %1981 = vmatpush1.bf16.msra.mxu0 0
      %1982 = vmatprep.subr.bf16.mxu0 0
      %1983 = vmatpush1.bf16.msra.mxu0 0
      %1984 = vmatprep.subr.bf16.mxu0 0
      %1985 = vmatpush1.bf16.msra.mxu0 0
      %1986 = vmatprep.subr.bf16.mxu0 0
      %1987 = vmatpush1.bf16.msra.mxu0 0
      %1988 = vmatprep.subr.bf16.mxu0 0
      %1989 = vmatpush1.bf16.msra.mxu0 0
      %1990 = vmatprep.subr.bf16.mxu0 0
      %1991 = vmatpush1.bf16.msra.mxu0 0
      %1992 = vmatprep.subr.bf16.mxu0 0
      %1993 = vmatpush1.bf16.msra.mxu0 0
      %1994 = vmatprep.subr.bf16.mxu0 0
      %1995 = vmatpush1.bf16.msra.mxu0 0
      %1996 = vmatprep.subr.bf16.mxu0 0
      %1997 = vmatpush1.bf16.msra.mxu0 0
      %1998 = vmatprep.subr.bf16.mxu0 0
      %1999 = vmatpush1.bf16.msra.mxu0 0
      %2000 = vmatprep.subr.bf16.mxu0 0
      %2001 = vmatpush1.bf16.msra.mxu0 0
      %2002 = vmatprep.mubr.bf16.mxu0 0
      %2003 = vmatmul.mubr.bf16.gmra.mrb[0].mxu0 %v1918
      %v2004 = vpop.f32.mrb[0].mxu0
      %v2005 = vadd.f32 0.0, %v2004
      %v2006 = vpop.f32.mrb[0].mxu0
      %v2007 = vpop.f32.mrb[0].mxu0
      %v2008 = vpop.f32.mrb[0].mxu0
      %2009 = vdwg.mxu0
      %v2010 = vld [vmem:[%s14] sm:$0xf]
      %2012 = vset.pattern.permute.xlu0 0
      %2013 = vperm.xlu0 %2012, %v2010
      %v2014 = vpop.permute.xlu0 %2013
      %v2016 = vmul.f32 %v1964, %v2014
      %v2017 = vmul.f32 %v1966, %v2014
      %v2018 = vmul.f32 %v2005, %v2014
      %v2019 = vld [vmem:[%s15] sm:$0xf]
      %2021 = vset.pattern.permute.xlu0 0
      %2022 = vperm.xlu0 %2021, %v2019
      %v2023 = vpop.permute.xlu0 %2022
      %v2025 = vadd.f32 %v2016, %v2023
      %v2026 = vadd.f32 %v2017, %v2023
      %v2027 = vadd.f32 %v2018, %v2023
      %v2028 = vmax.f32 %v2025, 0.0
      %v2029 = vmax.f32 %v2026, 0.0
      %v2030 = vmax.f32 %v2027, 0.0
      %2031 = vrot.lane.b32.xlu0 %v1682, 124
      %v2032 = vpop.permute.xlu0 %2031
      %2033 = vrot.lane.b32.xlu0 %v1683, 124
      %v2034 = vpop.permute.xlu0 %2033
      %2035 = vrot.lane.b32.xlu0 %v1684, 124
      %v2036 = vpop.permute.xlu0 %2035
      %2037 = vrot.lane.b32.xlu0 %v1685, 124
      %v2038 = vpop.permute.xlu0 %2037
      %v2039 = vsel %vm1054, %v2032, %v2034
      %v2040 = vsel %vm1054, %v2034, %v2036
      %v2041 = vsel %vm1054, %v2036, %v2038
      %2046 = vrot.lane.b32.xlu0 %v1682, 80
      %v2047 = vpop.permute.xlu0 %2046
      %v2048 = vsel %vm781, %v2047, %v1765
      %2052 = vrot.lane.b32.xlu0 %v1683, 76
      %v2053 = vpop.permute.xlu0 %2052
      %2054 = vrot.lane.b32.xlu0 %v1684, 76
      %v2055 = vpop.permute.xlu0 %2054
      %2056 = vrot.lane.b32.xlu0 %v1685, 76
      %v2057 = vpop.permute.xlu0 %2056
      %2058 = vrot.lane.b32.xlu0 %v1686, 76
      %v2059 = vpop.permute.xlu0 %2058
      %v2060 = vsel %vm1076, %v2053, %v2055
      %v2061 = vsel %vm1076, %v2055, %v2057
      %v2062 = vsel %vm1076, %v2057, %v2059
      %2067 = vrot.lane.b32.xlu0 %v1683, 32
      %v2068 = vpop.permute.xlu0 %2067
      %2069 = vrot.lane.b32.xlu0 %v1684, 32
      %v2070 = vpop.permute.xlu0 %2069
      %2071 = vrot.lane.b32.xlu0 %v1685, 32
      %v2072 = vpop.permute.xlu0 %2071
      %2073 = vrot.lane.b32.xlu0 %v1686, 32
      %v2074 = vpop.permute.xlu0 %2073
      %v2075 = vsel %vm1092, %v2068, %v2070
      %v2076 = vsel %vm1092, %v2070, %v2072
      %v2077 = vsel %vm1092, %v2072, %v2074
      %2082 = vrot.lane.b32.xlu0 %v1683, 30
      %v2083 = vpop.permute.xlu0 %2082
      %2084 = vrot.lane.b32.xlu0 %v1684, 30
      %v2085 = vpop.permute.xlu0 %2084
      %2086 = vrot.lane.b32.xlu0 %v1685, 30
      %v2087 = vpop.permute.xlu0 %2086
      %2088 = vrot.lane.b32.xlu0 %v1686, 30
      %v2089 = vpop.permute.xlu0 %2088
      %v2090 = vsel %vm1108, %v2083, %v2085
      %v2091 = vsel %vm1108, %v2085, %v2087
      %v2092 = vsel %vm1108, %v2087, %v2089
      %2097 = vrot.lane.b32.xlu0 %v1683, 28
      %v2098 = vpop.permute.xlu0 %2097
      %2099 = vrot.lane.b32.xlu0 %v1684, 28
      %v2100 = vpop.permute.xlu0 %2099
      %2101 = vrot.lane.b32.xlu0 %v1685, 28
      %v2102 = vpop.permute.xlu0 %2101
      %2103 = vrot.lane.b32.xlu0 %v1686, 28
      %v2104 = vpop.permute.xlu0 %2103
      %v2105 = vsel %vm1124, %v2098, %v2100
      %v2106 = vsel %vm1124, %v2100, %v2102
      %v2107 = vsel %vm1124, %v2102, %v2104
      %v2112 = vpack.c.bf16 %v1714, %v1682
      %v2113 = vpack.c.bf16 %v1715, %v1683
      %v2114 = vpack.c.bf16 %v1716, %v1684
      %v2115 = vpack.c.bf16 %v1713, %v1685
      %v2116 = vpack.c.bf16 %v2048, %v2039
      %v2117 = vpack.c.bf16 %v1772, %v2040
      %v2118 = vpack.c.bf16 %v1773, %v2041
      %v2119 = vpack.c.bf16 %v1769, %v2038
      %v2120 = vpack.c.bf16 %v2053, %v1795
      %v2121 = vpack.c.bf16 %v2060, %v1802
      %v2122 = vpack.c.bf16 %v2061, %v1803
      %v2123 = vpack.c.bf16 %v2062, %v1799
      %v2124 = vpack.c.bf16 %v2083, %v2068
      %v2125 = vpack.c.bf16 %v2090, %v2075
      %v2126 = vpack.c.bf16 %v2091, %v2076
      %v2127 = vpack.c.bf16 %v2092, %v2077
      %v2128 = vpack.c.bf16 %v2098, %v2098
      %v2129 = vpack.c.bf16 %v2105, %v2105
      %v2130 = vpack.c.bf16 %v2106, %v2106
      %v2131 = vpack.c.bf16 %v2107, %v2107
      %v2132 = vld [vmem:[%s13] sm:$0x3]
      %2153 = vrot.lane.b32.xlu0 %v2112, 50
      %v2154 = vpop.permute.xlu0 %2153
      %2155 = vrot.lane.b32.xlu0 %v2113, 50
      %v2156 = vpop.permute.xlu0 %2155
      %2157 = vrot.lane.b32.xlu0 %v2114, 50
      %v2158 = vpop.permute.xlu0 %2157
      %2159 = vrot.lane.b32.xlu0 %v2115, 50
      %v2160 = vpop.permute.xlu0 %2159
      %2161 = vrot.lane.b32.xlu0 %v2116, 50
      %v2162 = vpop.permute.xlu0 %2161
      %2163 = vrot.lane.b32.xlu0 %v2117, 50
      %v2164 = vpop.permute.xlu0 %2163
      %2165 = vrot.lane.b32.xlu0 %v2118, 50
      %v2166 = vpop.permute.xlu0 %2165
      %2167 = vrot.lane.b32.xlu0 %v2119, 50
      %v2168 = vpop.permute.xlu0 %2167
      %2169 = vrot.lane.b32.xlu0 %v2120, 50
      %v2170 = vpop.permute.xlu0 %2169
      %2171 = vrot.lane.b32.xlu0 %v2121, 50
      %v2172 = vpop.permute.xlu0 %2171
      %2173 = vrot.lane.b32.xlu0 %v2122, 50
      %v2174 = vpop.permute.xlu0 %2173
      %2175 = vrot.lane.b32.xlu0 %v2123, 50
      %v2176 = vpop.permute.xlu0 %2175
      %2177 = vrot.lane.b32.xlu0 %v2124, 50
      %v2178 = vpop.permute.xlu0 %2177
      %2179 = vrot.lane.b32.xlu0 %v2125, 50
      %v2180 = vpop.permute.xlu0 %2179
      %2181 = vrot.lane.b32.xlu0 %v2126, 50
      %v2182 = vpop.permute.xlu0 %2181
      %2183 = vrot.lane.b32.xlu0 %v2127, 50
      %v2184 = vpop.permute.xlu0 %2183
      %2185 = vrot.lane.b32.xlu0 %v2128, 50
      %v2186 = vpop.permute.xlu0 %2185
      %2187 = vrot.lane.b32.xlu0 %v2129, 50
      %v2188 = vpop.permute.xlu0 %2187
      %2189 = vrot.lane.b32.xlu0 %v2130, 50
      %v2190 = vpop.permute.xlu0 %2189
      %2191 = vrot.lane.b32.xlu0 %v2131, 50
      %v2192 = vpop.permute.xlu0 %2191
      %v2193 = vsel %vm1213, %v2154, %v2156
      %v2194 = vsel %vm1213, %v2156, %v2158
      %v2195 = vsel %vm1213, %v2158, %v2160
      %v2196 = vsel %vm1213, %v2162, %v2164
      %v2197 = vsel %vm1213, %v2164, %v2166
      %v2198 = vsel %vm1213, %v2166, %v2168
      %v2199 = vsel %vm1213, %v2170, %v2172
      %v2200 = vsel %vm1213, %v2172, %v2174
      %v2201 = vsel %vm1213, %v2174, %v2176
      %v2202 = vsel %vm1213, %v2178, %v2180
      %v2203 = vsel %vm1213, %v2180, %v2182
      %v2204 = vsel %vm1213, %v2182, %v2184
      %v2205 = vsel %vm1213, %v2186, %v2188
      %v2206 = vsel %vm1213, %v2188, %v2190
      %v2207 = vsel %vm1213, %v2190, %v2192
      %v2221 = vsel %vm930, %v2132, 0
      %v2224 = vsel %vm934, %v2205, 0
      %v2227 = vsel %vm934, %v2206, 0
      %v2230 = vsel %vm934, %v2207, 0
      %2232 = vmatprep.subr.bf16.mxu0 %v2194
      %2233 = vmatpush1.bf16.msra.mxu0 %v2193
      %2234 = vmatprep.subr.bf16.mxu0 %v2197
      %2235 = vmatpush1.bf16.msra.mxu0 %v2196
      %2236 = vmatprep.subr.bf16.mxu0 %v2200
      %2237 = vmatpush1.bf16.msra.mxu0 %v2199
      %2238 = vmatprep.subr.bf16.mxu0 %v2203
      %2239 = vmatpush1.bf16.msra.mxu0 %v2202
      %2240 = vmatprep.subr.bf16.mxu0 %v2227
      %2241 = vmatpush1.bf16.msra.mxu0 %v2224
      %2242 = vmatprep.subr.bf16.mxu0 0
      %2243 = vmatpush1.bf16.msra.mxu0 0
      %2244 = vmatprep.subr.bf16.mxu0 0
      %2245 = vmatpush1.bf16.msra.mxu0 0
      %2246 = vmatprep.subr.bf16.mxu0 0
      %2247 = vmatpush1.bf16.msra.mxu0 0
      %2248 = vmatprep.subr.bf16.mxu0 0
      %2249 = vmatpush1.bf16.msra.mxu0 0
      %2250 = vmatprep.subr.bf16.mxu0 0
      %2251 = vmatpush1.bf16.msra.mxu0 0
      %2252 = vmatprep.subr.bf16.mxu0 0
      %2253 = vmatpush1.bf16.msra.mxu0 0
      %2254 = vmatprep.subr.bf16.mxu0 0
      %2255 = vmatpush1.bf16.msra.mxu0 0
      %2256 = vmatprep.subr.bf16.mxu0 0
      %2257 = vmatpush1.bf16.msra.mxu0 0
      %2258 = vmatprep.subr.bf16.mxu0 0
      %2259 = vmatpush1.bf16.msra.mxu0 0
      %2260 = vmatprep.subr.bf16.mxu0 0
      %2261 = vmatpush1.bf16.msra.mxu0 0
      %2262 = vmatprep.subr.bf16.mxu0 0
      %2263 = vmatpush1.bf16.msra.mxu0 0
      %2264 = vmatprep.mubr.bf16.mxu0 0
      %2265 = vmatmul.mubr.bf16.gmra.mrb[0].mxu0 %v2221
      %v2266 = vpop.f32.mrb[0].mxu0
      %v2267 = vadd.f32 0.0, %v2266
      %v2268 = vpop.f32.mrb[0].mxu0
      %v2269 = vadd.f32 0.0, %v2268
      %v2270 = vpop.f32.mrb[0].mxu0
      %v2271 = vpop.f32.mrb[0].mxu0
      %2272 = vdwg.mxu0
      %2273 = vmatprep.subr.bf16.mxu0 0
      %2274 = vmatpush1.bf16.msra.mxu0 %v2195
      %2275 = vmatprep.subr.bf16.mxu0 0
      %2276 = vmatpush1.bf16.msra.mxu0 %v2198
      %2277 = vmatprep.subr.bf16.mxu0 0
      %2278 = vmatpush1.bf16.msra.mxu0 %v2201
      %2279 = vmatprep.subr.bf16.mxu0 0
      %2280 = vmatpush1.bf16.msra.mxu0 %v2204
      %2281 = vmatprep.subr.bf16.mxu0 0
      %2282 = vmatpush1.bf16.msra.mxu0 %v2230
      %2283 = vmatprep.subr.bf16.mxu0 0
      %2284 = vmatpush1.bf16.msra.mxu0 0
      %2285 = vmatprep.subr.bf16.mxu0 0
      %2286 = vmatpush1.bf16.msra.mxu0 0
      %2287 = vmatprep.subr.bf16.mxu0 0
      %2288 = vmatpush1.bf16.msra.mxu0 0
      %2289 = vmatprep.subr.bf16.mxu0 0
      %2290 = vmatpush1.bf16.msra.mxu0 0
      %2291 = vmatprep.subr.bf16.mxu0 0
      %2292 = vmatpush1.bf16.msra.mxu0 0
      %2293 = vmatprep.subr.bf16.mxu0 0
      %2294 = vmatpush1.bf16.msra.mxu0 0
      %2295 = vmatprep.subr.bf16.mxu0 0
      %2296 = vmatpush1.bf16.msra.mxu0 0
      %2297 = vmatprep.subr.bf16.mxu0 0
      %2298 = vmatpush1.bf16.msra.mxu0 0
      %2299 = vmatprep.subr.bf16.mxu0 0
      %2300 = vmatpush1.bf16.msra.mxu0 0
      %2301 = vmatprep.subr.bf16.mxu0 0
      %2302 = vmatpush1.bf16.msra.mxu0 0
      %2303 = vmatprep.subr.bf16.mxu0 0
      %2304 = vmatpush1.bf16.msra.mxu0 0
      %2305 = vmatprep.mubr.bf16.mxu0 0
      %2306 = vmatmul.mubr.bf16.gmra.mrb[0].mxu0 %v2221
      %v2307 = vpop.f32.mrb[0].mxu0
      %v2308 = vadd.f32 0.0, %v2307
      %v2309 = vpop.f32.mrb[0].mxu0
      %v2310 = vpop.f32.mrb[0].mxu0
      %v2311 = vpop.f32.mrb[0].mxu0
      %2312 = vdwg.mxu0
      %v2313 = vld [vmem:[%s16] sm:$0xf]
      %2315 = vset.pattern.permute.xlu0 0
      %2316 = vperm.xlu0 %2315, %v2313
      %v2317 = vpop.permute.xlu0 %2316
      %v2319 = vmul.f32 %v2267, %v2317
      %v2320 = vmul.f32 %v2269, %v2317
      %v2321 = vmul.f32 %v2308, %v2317
      %v2322 = vld [vmem:[%s17] sm:$0xf]
      %2324 = vset.pattern.permute.xlu0 0
      %2325 = vperm.xlu0 %2324, %v2322
      %v2326 = vpop.permute.xlu0 %2325
      %v2328 = vadd.f32 %v2319, %v2326
      %v2329 = vadd.f32 %v2320, %v2326
      %v2330 = vadd.f32 %v2321, %v2326
      %v2331 = vmax.f32 %v2328, 0.0
      %v2332 = vmax.f32 %v2329, 0.0
      %v2333 = vmax.f32 %v2330, 0.0
      %v2334 = vadd.f32 %v2028, %v2331
      %v2335 = vadd.f32 %v2029, %v2332
      %v2336 = vadd.f32 %v2030, %v2333
      %v2337 = vmul.f32 %v2334, %v1362
      %v2338 = vmul.f32 %v2335, %v1366
      %v2339 = vmul.f32 %v2336, %v1370
      %v2340 = vsel %vm934, %v2337, 0.0
      %v2341 = vsel %vm934, %v2338, 0.0
      %v2342 = vadd.f32 %v2340, %v2341
      %v2343 = vsel %vm934, %v2339, 0.0
      %v2344 = vadd.f32 %v2342, %v2343
      %2345 = vadd.xlane.f32.xlu0 %v2344
      %v2346 = vpop.xlane.xlu0 %2345
      %v2347 = vmul.f32 %v2346, 0.00390625
      %v2348 = vld [vmem:[%s18] sm:$0xff]
      %v2349 = vld [vmem:[%s18 + $0x8] sm:$0xff]
      %v2350 = vld [vmem:[%s18 + $0x10] sm:$0xff]
      %v2351 = vld [vmem:[%s18 + $0x18] sm:$0xff]
      %v2352 = vld [vmem:[%s19] sm:$0xff]
      %v2353 = vld [vmem:[%s19 + $0x8] sm:$0xff]
      %v2354 = vld [vmem:[%s19 + $0x10] sm:$0xff]
      %v2355 = vld [vmem:[%s19 + $0x18] sm:$0xff]
      %v2357 = vsel %vm1393, %v2348, 0
      %v2360 = vsel %vm1393, %v2349, 0
      %v2363 = vsel %vm1393, %v2350, 0
      %v2366 = vsel %vm1393, %v2351, 0
      %v2369 = vsel %vm934, %v2347, 0
      %2371 = vmatprep.subr.mxu0 0.0
      %2372 = vmatpush1.msra.mxu0 %v2369
      %2373 = vmatprep.subr.mxu0 0.0
      %2374 = vmatpush1.msra.mxu0 0.0
      %2375 = vmatprep.subr.mxu0 0.0
      %2376 = vmatpush1.msra.mxu0 0.0
      %2377 = vmatprep.subr.mxu0 0.0
      %2378 = vmatpush1.msra.mxu0 0.0
      %2379 = vmatprep.subr.mxu0 0.0
      %2380 = vmatpush1.msra.mxu0 0.0
      %2381 = vmatprep.subr.mxu0 0.0
      %2382 = vmatpush1.msra.mxu0 0.0
      %2383 = vmatprep.subr.mxu0 0.0
      %2384 = vmatpush1.msra.mxu0 0.0
      %2385 = vmatprep.subr.mxu0 0.0
      %2386 = vmatpush1.msra.mxu0 0.0
      %2387 = vmatprep.subr.mxu0 0.0
      %2388 = vmatpush1.msra.mxu0 0.0
      %2389 = vmatprep.subr.mxu0 0.0
      %2390 = vmatpush1.msra.mxu0 0.0
      %2391 = vmatprep.subr.mxu0 0.0
      %2392 = vmatpush1.msra.mxu0 0.0
      %2393 = vmatprep.subr.mxu0 0.0
      %2394 = vmatpush1.msra.mxu0 0.0
      %2395 = vmatprep.subr.mxu0 0.0
      %2396 = vmatpush1.msra.mxu0 0.0
      %2397 = vmatprep.subr.mxu0 0.0
      %2398 = vmatpush1.msra.mxu0 0.0
      %2399 = vmatprep.subr.mxu0 0.0
      %2400 = vmatpush1.msra.mxu0 0.0
      %2401 = vmatprep.subr.mxu0 0.0
      %2402 = vmatpush1.msra.mxu0 0.0
      %2403 = vmatprep.subr.mxu0 0.0
      %2404 = vmatpush1.msra.mxu0 0.0
      %2405 = vmatprep.subr.mxu0 0.0
      %2406 = vmatpush1.msra.mxu0 0.0
      %2407 = vmatprep.subr.mxu0 0.0
      %2408 = vmatpush1.msra.mxu0 0.0
      %2409 = vmatprep.subr.mxu0 0.0
      %2410 = vmatpush1.msra.mxu0 0.0
      %2411 = vmatprep.subr.mxu0 0.0
      %2412 = vmatpush1.msra.mxu0 0.0
      %2413 = vmatprep.subr.mxu0 0.0
      %2414 = vmatpush1.msra.mxu0 0.0
      %2415 = vmatprep.subr.mxu0 0.0
      %2416 = vmatpush1.msra.mxu0 0.0
      %2417 = vmatprep.subr.mxu0 0.0
      %2418 = vmatpush1.msra.mxu0 0.0
      %2419 = vmatprep.subr.mxu0 0.0
      %2420 = vmatpush1.msra.mxu0 0.0
      %2421 = vmatprep.subr.mxu0 0.0
      %2422 = vmatpush1.msra.mxu0 0.0
      %2423 = vmatprep.subr.mxu0 0.0
      %2424 = vmatpush1.msra.mxu0 0.0
      %2425 = vmatprep.subr.mxu0 0.0
      %2426 = vmatpush1.msra.mxu0 0.0
      %2427 = vmatprep.subr.mxu0 0.0
      %2428 = vmatpush1.msra.mxu0 0.0
      %2429 = vmatprep.subr.mxu0 0.0
      %2430 = vmatpush1.msra.mxu0 0.0
      %2431 = vmatprep.subr.mxu0 0.0
      %2432 = vmatpush1.msra.mxu0 0.0
      %2433 = vmatprep.subr.mxu0 0.0
      %2434 = vmatpush1.msra.mxu0 0.0
      %2435 = vmatprep.mubr.f32.mxu0 0.0
      %2436 = vmatmul.mubr.f32.gmra.mrb[0].mxu0 %v2357
      %v2437 = vpop.f32.mrb[0].mxu0
      %v2438 = vadd.f32 %v2352, %v2437
      %v2439 = vpop.f32.mrb[0].mxu0
      %2440 = vmatprep.mubr.f32.mxu0 0.0
      %2441 = vmatmul.mubr.f32.gmra.mrb[0].mxu0 %v2360
      %v2442 = vpop.f32.mrb[0].mxu0
      %v2443 = vadd.f32 %v2353, %v2442
      %v2444 = vpop.f32.mrb[0].mxu0
      %2445 = vmatprep.mubr.f32.mxu0 0.0
      %2446 = vmatmul.mubr.f32.gmra.mrb[0].mxu0 %v2363
      %v2447 = vpop.f32.mrb[0].mxu0
      %v2448 = vadd.f32 %v2354, %v2447
      %v2449 = vpop.f32.mrb[0].mxu0
      %2450 = vmatprep.mubr.f32.mxu0 0.0
      %2451 = vmatmul.mubr.f32.gmra.mrb[0].mxu0 %v2366
      %v2452 = vpop.f32.mrb[0].mxu0
      %v2453 = vadd.f32 %v2355, %v2452
      %v2454 = vpop.f32.mrb[0].mxu0
      %2455 = vdwg.mxu0
      %v2456 = vmax.f32 %v2438, 0.0
      %v2457 = vmax.f32 %v2443, 0.0
      %v2458 = vmax.f32 %v2448, 0.0
      %v2459 = vmax.f32 %v2453, 0.0
      %v2460 = vld [vmem:[%s20] sm:$0xf]
      %v2462 = vsel %vm1092, %v2460, 0
      %2464 = vmatprep.subr.mxu0 0.0
      %2465 = vmatpush1.msra.mxu0 %v2456
      %2466 = vmatprep.subr.mxu0 0.0
      %2467 = vmatpush1.msra.mxu0 %v2457
      %2468 = vmatprep.subr.mxu0 0.0
      %2469 = vmatpush1.msra.mxu0 %v2458
      %2470 = vmatprep.subr.mxu0 0.0
      %2471 = vmatpush1.msra.mxu0 %v2459
      %2472 = vmatprep.subr.mxu0 0.0
      %2473 = vmatpush1.msra.mxu0 0.0
      %2474 = vmatprep.subr.mxu0 0.0
      %2475 = vmatpush1.msra.mxu0 0.0
      %2476 = vmatprep.subr.mxu0 0.0
      %2477 = vmatpush1.msra.mxu0 0.0
      %2478 = vmatprep.subr.mxu0 0.0
      %2479 = vmatpush1.msra.mxu0 0.0
      %2480 = vmatprep.subr.mxu0 0.0
      %2481 = vmatpush1.msra.mxu0 0.0
      %2482 = vmatprep.subr.mxu0 0.0
      %2483 = vmatpush1.msra.mxu0 0.0
      %2484 = vmatprep.subr.mxu0 0.0
      %2485 = vmatpush1.msra.mxu0 0.0
      %2486 = vmatprep.subr.mxu0 0.0
      %2487 = vmatpush1.msra.mxu0 0.0
      %2488 = vmatprep.subr.mxu0 0.0
      %2489 = vmatpush1.msra.mxu0 0.0
      %2490 = vmatprep.subr.mxu0 0.0
      %2491 = vmatpush1.msra.mxu0 0.0
      %2492 = vmatprep.subr.mxu0 0.0
      %2493 = vmatpush1.msra.mxu0 0.0
      %2494 = vmatprep.subr.mxu0 0.0
      %2495 = vmatpush1.msra.mxu0 0.0
      %2496 = vmatprep.subr.mxu0 0.0
      %2497 = vmatpush1.msra.mxu0 0.0
      %2498 = vmatprep.subr.mxu0 0.0
      %2499 = vmatpush1.msra.mxu0 0.0
      %2500 = vmatprep.subr.mxu0 0.0
      %2501 = vmatpush1.msra.mxu0 0.0
      %2502 = vmatprep.subr.mxu0 0.0
      %2503 = vmatpush1.msra.mxu0 0.0
      %2504 = vmatprep.subr.mxu0 0.0
      %2505 = vmatpush1.msra.mxu0 0.0
      %2506 = vmatprep.subr.mxu0 0.0
      %2507 = vmatpush1.msra.mxu0 0.0
      %2508 = vmatprep.subr.mxu0 0.0
      %2509 = vmatpush1.msra.mxu0 0.0
      %2510 = vmatprep.subr.mxu0 0.0
      %2511 = vmatpush1.msra.mxu0 0.0
      %2512 = vmatprep.subr.mxu0 0.0
      %2513 = vmatpush1.msra.mxu0 0.0
      %2514 = vmatprep.subr.mxu0 0.0
      %2515 = vmatpush1.msra.mxu0 0.0
      %2516 = vmatprep.subr.mxu0 0.0
      %2517 = vmatpush1.msra.mxu0 0.0
      %2518 = vmatprep.subr.mxu0 0.0
      %2519 = vmatpush1.msra.mxu0 0.0
      %2520 = vmatprep.subr.mxu0 0.0
      %2521 = vmatpush1.msra.mxu0 0.0
      %2522 = vmatprep.subr.mxu0 0.0
      %2523 = vmatpush1.msra.mxu0 0.0
      %2524 = vmatprep.subr.mxu0 0.0
      %2525 = vmatpush1.msra.mxu0 0.0
      %2526 = vmatprep.subr.mxu0 0.0
      %2527 = vmatpush1.msra.mxu0 0.0
      %2528 = vmatprep.mubr.f32.mxu0 0.0
      %2529 = vmatmul.mubr.f32.gmra.mrb[0].mxu0 %v2462
      %v2530 = vpop.f32.mrb[0].mxu0
      %v2531 = vadd.f32 0.0, %v2530
      %v2532 = vpop.f32.mrb[0].mxu0
      %2533 = vdwg.mxu0
      %v2534 = vld [vmem:[%s21] sm:$0xf]
      %v2536 = vsel %vm1092, %v2534, 0
      %2538 = vmatprep.subr.mxu0 0.0
      %2539 = vmatpush1.msra.mxu0 %v2456
      %2540 = vmatprep.subr.mxu0 0.0
      %2541 = vmatpush1.msra.mxu0 %v2457
      %2542 = vmatprep.subr.mxu0 0.0
      %2543 = vmatpush1.msra.mxu0 %v2458
      %2544 = vmatprep.subr.mxu0 0.0
      %2545 = vmatpush1.msra.mxu0 %v2459
      %2546 = vmatprep.subr.mxu0 0.0
      %2547 = vmatpush1.msra.mxu0 0.0
      %2548 = vmatprep.subr.mxu0 0.0
      %2549 = vmatpush1.msra.mxu0 0.0
      %2550 = vmatprep.subr.mxu0 0.0
      %2551 = vmatpush1.msra.mxu0 0.0
      %2552 = vmatprep.subr.mxu0 0.0
      %2553 = vmatpush1.msra.mxu0 0.0
      %2554 = vmatprep.subr.mxu0 0.0
      %2555 = vmatpush1.msra.mxu0 0.0
      %2556 = vmatprep.subr.mxu0 0.0
      %2557 = vmatpush1.msra.mxu0 0.0
      %2558 = vmatprep.subr.mxu0 0.0
      %2559 = vmatpush1.msra.mxu0 0.0
      %2560 = vmatprep.subr.mxu0 0.0
      %2561 = vmatpush1.msra.mxu0 0.0
      %2562 = vmatprep.subr.mxu0 0.0
      %2563 = vmatpush1.msra.mxu0 0.0
      %2564 = vmatprep.subr.mxu0 0.0
      %2565 = vmatpush1.msra.mxu0 0.0
      %2566 = vmatprep.subr.mxu0 0.0
      %2567 = vmatpush1.msra.mxu0 0.0
      %2568 = vmatprep.subr.mxu0 0.0
      %2569 = vmatpush1.msra.mxu0 0.0
      %2570 = vmatprep.subr.mxu0 0.0
      %2571 = vmatpush1.msra.mxu0 0.0
      %2572 = vmatprep.subr.mxu0 0.0
      %2573 = vmatpush1.msra.mxu0 0.0
      %2574 = vmatprep.subr.mxu0 0.0
      %2575 = vmatpush1.msra.mxu0 0.0
      %2576 = vmatprep.subr.mxu0 0.0
      %2577 = vmatpush1.msra.mxu0 0.0
      %2578 = vmatprep.subr.mxu0 0.0
      %2579 = vmatpush1.msra.mxu0 0.0
      %2580 = vmatprep.subr.mxu0 0.0
      %2581 = vmatpush1.msra.mxu0 0.0
      %2582 = vmatprep.subr.mxu0 0.0
      %2583 = vmatpush1.msra.mxu0 0.0
      %2584 = vmatprep.subr.mxu0 0.0
      %2585 = vmatpush1.msra.mxu0 0.0
      %2586 = vmatprep.subr.mxu0 0.0
      %2587 = vmatpush1.msra.mxu0 0.0
      %2588 = vmatprep.subr.mxu0 0.0
      %2589 = vmatpush1.msra.mxu0 0.0
      %2590 = vmatprep.subr.mxu0 0.0
      %2591 = vmatpush1.msra.mxu0 0.0
      %2592 = vmatprep.subr.mxu0 0.0
      %2593 = vmatpush1.msra.mxu0 0.0
      %2594 = vmatprep.subr.mxu0 0.0
      %2595 = vmatpush1.msra.mxu0 0.0
      %2596 = vmatprep.subr.mxu0 0.0
      %2597 = vmatpush1.msra.mxu0 0.0
      %2598 = vmatprep.subr.mxu0 0.0
      %2599 = vmatpush1.msra.mxu0 0.0
      %2600 = vmatprep.subr.mxu0 0.0
      %2601 = vmatpush1.msra.mxu0 0.0
      %2602 = vmatprep.mubr.f32.mxu0 0.0
      %2603 = vmatmul.mubr.f32.gmra.mrb[0].mxu0 %v2536
      %v2604 = vpop.f32.mrb[0].mxu0
      %v2605 = vadd.f32 0.0, %v2604
      %v2606 = vpop.f32.mrb[0].mxu0
      %2607 = vdwg.mxu0
      %v2608 = vsub.f32 %v2605, %v2531
      %v2609 = vmul.f32 %v2608, 1.442695
      %v2610 = vpow.pop %v2609
      %v2611 = vadd.f32 %v2610, 1.0
      %v2612 = vrcp.pop %v2611
      %2614 = vset.pattern.permute.xlu0 0
      %2615 = vperm.xlu0 %2614, %v2612
      %v2616 = vpop.permute.xlu0 %2615
      %v2618 = vmul.f32 %v2028, %v2616
      %v2619 = vmul.f32 %v2029, %v2616
      %v2620 = vmul.f32 %v2030, %v2616
      %v2621 = vsub.f32 1.0, %v2612
      %2623 = vset.pattern.permute.xlu0 0
      %2624 = vperm.xlu0 %2623, %v2621
      %v2625 = vpop.permute.xlu0 %2624
      %v2627 = vmul.f32 %v2331, %v2625
      %v2628 = vmul.f32 %v2332, %v2625
      %v2629 = vmul.f32 %v2333, %v2625
      %v2630 = vadd.f32 %v2618, %v2627
      %v2631 = vadd.f32 %v2619, %v2628
      %v2632 = vadd.f32 %v2620, %v2629
      %v2635 = vcombine.low %v2630, %v2631
      %2637 = vst [vmem:[%s683] sm:$0xff] %v2635
      %2638 = vst [vmem:[%s683 + $0x8] sm:$0xf] %v2632
      %p2639 = scmp.lt.s32.totalorder %s33, 1
      %s2640 = scalar_select %p2639, %s33, 1
      %s2641 = smul.addr %s2640, 3
      %s2642 = smul.addr %s2641, 4
      %s2643 = scalar_lea.vmem %s22, %s2642
      // Predicated region
      $region109: #{up1_forward.1} parent=107 // pred_check
        %p2644 = pneg %p518
      $region110: #{up1_forward.1} parent=107 // pred_check_branch
        %2646 = sbr.rel (%p2644) target = $region112
      $region111: #{up1_forward.1} parent=107 // pred_region
        _
      $region112: #{up1_forward.1} parent=107 // pred_fallthru
        _
    $region108: #{up1_forward.1} parent=5 // pred_fallthru
      _
    %p2647 = scmp.le.s32.totalorder 2, %s28
    // Predicated region
    $region113: #{up1_forward.1} parent=5 // pred_check
      %p2648 = pneg %p2647
    $region114: #{up1_forward.1} parent=5 // pred_check_branch
      %2650 = sbr.rel (%p2648) target = $region116
    $region115: #{up1_forward.1} parent=5 // pred_region
      %s2651 = ssub.s32 %s28, 2
      // Predicated region
      $region117: #{up1_forward.1} parent=115 // pred_check
        %p2652 = pneg %p524
      $region118: #{up1_forward.1} parent=115 // pred_check_branch
        %2654 = sbr.rel (%p2652) target = $region120
      $region119: #{up1_forward.1} parent=115 // pred_region
        %p2655 = scmp.lt.s32.totalorder %s34, 1
        %s2656 = scalar_select %p2655, %s34, 1
        %s2657 = smul.addr %s2656, 3
        %s2658 = smul.addr %s2657, 4
        %s2659 = scalar_lea.vmem %s22, %s2658
      $region120: #{up1_forward.1} parent=115 // pred_fallthru
        _
    $region116: #{up1_forward.1} parent=5 // pred_fallthru
      _
  $region6: #{up1_forward.1} parent=0 // loop_footer
    %s32 = sadd.s32 1, %s28
  $region7: #{up1_forward.1} parent=0 // loop_footer_branch
    %27 = sbr.rel target = $region3
  $region8: #{up1_forward.1} parent=0 // loop_exit
    _

</llo_original>
